<compile_context>
chip_gen: v6e
topology: v6e:2x2x1
jax: 0.10.0
libtpu: 0.0.40
codegen_flags: <defaults>
</compile_context>

<pallas_src>
import functools
import math

import jax
import jax.numpy as jnp
from jax import lax
from jax.experimental import pallas as pl
from jax.experimental.pallas import tpu as pltpu

D = 96          # true model dim (fixed by the PyTorch module)
NH = 2          # attention heads
DH = D // NH    # 48, true per-head dim
DP = 128        # lane-padded model dim used inside the kernel
DHP = 64        # lane-padded per-head dim
CONV_NUM = 4    # number of depthwise-separable conv blocks
EPS = 1e-5      # nn.LayerNorm default eps


def timing_signal(length, channels, min_timescale=1.0, max_timescale=10000.0):
    """JAX port of get_timing_signal (channels even for D=96, no zero-pad)."""
    position = jnp.arange(length, dtype=jnp.float32)
    num_timescales = channels // 2
    log_inc = math.log(float(max_timescale) / float(min_timescale)) / (float(num_timescales) - 1)
    inv = min_timescale * jnp.exp(
        jnp.arange(num_timescales, dtype=jnp.float32) * -log_inc)
    scaled = position[:, None] * inv[None, :]
    return jnp.concatenate([jnp.sin(scaled), jnp.cos(scaled)], axis=1)  # [L, D]


def _ln_padded(v, g, b):
    """LayerNorm over the true D channels of a DP-wide, zero-padded tensor.

    Requires v[..., D:] == 0 (guaranteed by zero-padded weights upstream).
    Uses E[x^2] - mu^2 so no lane mask is needed; var clamped at 0 to guard
    against catastrophic cancellation for large activations.
    """
    mu = jnp.sum(v, axis=-1, keepdims=True) * (1.0 / D)
    ms = jnp.sum(v * v, axis=-1, keepdims=True) * (1.0 / D)
    var = jnp.maximum(ms - mu * mu, 0.0)
    return (v - mu) * lax.rsqrt(var + EPS) * g + b


def _ln_ref(v, g, b):
    mu = jnp.mean(v, axis=-1, keepdims=True)
    var = jnp.mean((v - mu) ** 2, axis=-1, keepdims=True)
    return (v - mu) * lax.rsqrt(var + EPS) * g + b


def encoder_block_kernel(x_ref, pos_ref, mask_ref,
                         lnc_g_ref, lnc_b_ref, dw_ref, pw_w_ref, pw_b_ref,
                         ln12_ref, wqkv_ref, ffn_w_ref, ffn_b_ref,
                         out_ref, att_ref, *, use_bf16_exp):
    TB, L, _ = x_ref.shape
    R = TB * L

    # ---- positional encoding (pad lanes of x and pos are both zero) ----
    h = (x_ref[...] + pos_ref[...]).reshape(R, DP)             # [R, DP] f32
    neg = (-1e30) * (1.0 - mask_ref[...])                      # [TB, 1, L] additive key mask

    # ---- conv stack: LayerNorm -> (dropout no-op) -> depthwise*scale -> pointwise + ReLU ----
    for i in range(CONV_NUM):
        ln = _ln_padded(h, lnc_g_ref[i:i + 1, :], lnc_b_ref[i:i + 1, :])
        dw = (ln * dw_ref[i:i + 1, :]).astype(jnp.bfloat16)
        h = jnp.maximum(
            jnp.dot(dw, pw_w_ref[i], preferred_element_type=jnp.float32)
            + pw_b_ref[i:i + 1, :], 0.0)

    # ---- self-attention ----
    # Single fused QKV projection: [R, 128] x [128, NH*3*64] = [R, 384],
    # then 64-lane-aligned slices per head (query scale folded into Wq).
    ln1 = _ln_padded(h, ln12_ref[0:1, :], ln12_ref[1:2, :]).astype(jnp.bfloat16)
    qkv = jnp.dot(ln1, wqkv_ref[...],
                  preferred_element_type=jnp.float32).astype(jnp.bfloat16)  # [R, 384]

    # TODO(synk): for very long sequences (L >~ 1-2k, esp. v7x 64MiB VMEM) switch
    # the attention to a query-tiled online-softmax instead of full [L, L] logits.
    for hd in range(NH):
        base = hd * 3 * DHP
        qh = qkv[:, base:base + DHP].reshape(TB, L, DHP)
        kh = qkv[:, base + DHP:base + 2 * DHP].reshape(TB, L, DHP)
        vh = qkv[:, base + 2 * DHP:base + 3 * DHP].reshape(TB, L, DHP)
        # QK^T via transposed contraction (no explicit K transpose / XLU relayout).
        logits = lax.dot_general(
            qh, kh, dimension_numbers=(((2,), (2,)), ((0,), (0,))),
            preferred_element_type=jnp.float32) + neg           # [TB, L, L] f32
        m = jnp.max(logits, axis=-1, keepdims=True)
        if use_bf16_exp:
            # bf16 EUP on v6e/v7x; row-sum / reciprocal stay f32.
            e = jnp.exp((logits - m).astype(jnp.bfloat16))
            denom = jnp.sum(e.astype(jnp.float32), axis=-1, keepdims=True)
            w = e * pl.reciprocal(denom, approx=True).astype(jnp.bfloat16)
        else:
            e = jnp.exp(logits - m)
            denom = jnp.sum(e, axis=-1, keepdims=True)
            w = (e * pl.reciprocal(denom, approx=True)).astype(jnp.bfloat16)
        pv = lax.dot_general(                                   # [TB, L, DHP] f32
            w, vh, dimension_numbers=(((2,), (1,)), ((0,), (0,))),
            preferred_element_type=jnp.float32)
        # Store each head at its 64-lane offset ("head-padded" layout);
        # norm_2 / FFN_1 parameters were pre-permuted to this layout.
        att_ref[:, hd * DHP:(hd + 1) * DHP] = pv.reshape(R, DHP)

    att = att_ref[...]                                          # [R, DP] f32

    # ---- FFN ----
    ln2 = _ln_padded(att, ln12_ref[2:3, :], ln12_ref[3:4, :]).astype(jnp.bfloat16)
    f1 = jnp.maximum(
        jnp.dot(ln2, ffn_w_ref[0], preferred_element_type=jnp.float32)
        + ffn_b_ref[0:1, :], 0.0)
    f2 = (jnp.dot(f1.astype(jnp.bfloat16), ffn_w_ref[1], preferred_element_type=jnp.float32)
          + ffn_b_ref[1:2, :])
    out_ref[...] = f2.astype(out_ref.dtype).reshape(TB, L, DP)  # bf16 writeback


def prepare_params(p):
    """Pad / permute / cast the logical parameters for the lane-padded kernel."""
    bf = jnp.bfloat16

    def pad_last(v):                        # [..., D] -> [..., DP]
        return jnp.pad(v, [(0, 0)] * (v.ndim - 1) + [(0, DP - D)])

    def pad_mat(w):                         # [D, D] -> [DP, DP]
        return jnp.pad(w, ((0, DP - D), (0, DP - D)))

    def per_head_block(w):                  # [D, DH] -> [DP, DHP]
        return jnp.pad(w, ((0, DP - D), (0, DHP - DH)))

    def head_pad_vec(v):                    # [D] -> [DP] scattered to head-padded slots
        return jnp.pad(v.reshape(NH, DH), ((0, 0), (0, DHP - DH))).reshape(NH * DHP)

    def head_pad_rows(w):                   # [D, D] -> [DP, DP], rows in head-padded layout
        w = w.reshape(NH, DH, D)
        w = jnp.pad(w, ((0, 0), (0, DHP - DH), (0, DP - D)))
        return w.reshape(NH * DHP, DP)

    scale = DH ** (-0.5)
    wq_full = p["w_q"] * scale              # query scale folded into Wq
    wk_full = p["w_mem"][:, :D]
    wv_full = p["w_mem"][:, D:]

    # Fused per-head QKV weight: [DP, NH*3*DHP], layout per head = [q | k | v].
    blocks = []
    for hd in range(NH):
        sl = slice(hd * DH, (hd + 1) * DH)
        blocks += [per_head_block(wq_full[:, sl]),
                   per_head_block(wk_full[:, sl]),
                   per_head_block(wv_full[:, sl])]
    wqkv = jnp.concatenate(blocks, axis=1).astype(bf)

    return {
        "lnc_g": pad_last(p["lnc_g"]),
        "lnc_b": pad_last(p["lnc_b"]),
        "dw": pad_last(p["dw"]),
        "pw_w": jnp.pad(p["pw_w"], ((0, 0), (0, DP - D), (0, DP - D))).astype(bf),
        "pw_b": pad_last(p["pw_b"]),
        "ln12": jnp.stack([
            pad_last(p["ln12"][0]), pad_last(p["ln12"][1]),
            head_pad_vec(p["ln12"][2]), head_pad_vec(p["ln12"][3])]),
        "wqkv": wqkv,
        "ffn_w": jnp.stack([head_pad_rows(p["ffn_w"][0]),
                            pad_mat(p["ffn_w"][1])]).astype(bf),
        "ffn_b": pad_last(p["ffn_b"]),
    }


def _vmem_bytes(tb, L):
    """Honest per-grid-step VMEM estimate (see performance review)."""
    R = tb * L
    # [TB, L, L] f32 logits + exp copy + bf16 softmax-weights copy (per head,
    # processed sequentially) ~ 2.5x logits.
    logits = int(2.5 * R * L * 4)
    # h / ln / f1 / f2 / misc f32 row activations + qkv (f32 + bf16 copy).
    acts = R * DP * 4 * 10 + R * (3 * NH * DHP) * 6
    # Double-buffered input (f32) / output (bf16) / mask blocks.
    io = 2 * (R * DP * 4 + R * DP * 2 + tb * L * 4)
    # Resident (double-buffered) weights + att scratch + slack.
    consts = 2 * (CONV_NUM * DP * DP * 2 + 3 * NH * DP * DHP * 2
                  + 2 * DP * DP * 2) + R * DP * 4 + (1 << 20)
    return logits + acts + io + consts


def _pick_tb(B, L, vmem_budget, min_grid=1, max_rows=1024):
    """Largest divisor of B keeping the estimated VMEM peak inside budget,
    the flattened row block reasonable, and the grid >= min_grid steps."""
    best = 1
    for cand in range(1, B + 1):
        if B % cand:
            continue
        if cand * L > max_rows:
            continue
        if _vmem_bytes(cand, L) > vmem_budget:
            continue
        if cand > 1 and B // cand < min_grid:
            continue
        best = cand
    return best


def encoder_block_forward(x_ncl, mask, p):
    """x_ncl: [B, D, L] (PyTorch conv layout). mask: [B, L] floats. Returns [B, D, L] f32."""
    B, C, L = x_ncl.shape
    assert C == D
    kp = prepare_params(p)

    x = jnp.transpose(x_ncl, (0, 2, 1)).astype(jnp.float32)        # [B, L, D]
    x = jnp.pad(x, ((0, 0), (0, 0), (0, DP - D)))                  # [B, L, DP]
    pos = jnp.pad(timing_signal(L, D), ((0, 0), (0, DP - D)))      # [L, DP]
    mask3 = mask.astype(jnp.float32).reshape(B, 1, L)

    # Per-generation dispatch (trace-time Python, not traced).
    kind = jax.devices()[0].device_kind.lower()
    is_v7 = "v7" in kind
    use_bf16_exp = ("v6" in kind) or is_v7       # no bf16 EUP on v5e and older
    vmem_limit = (40 << 20) if is_v7 else (64 << 20)
    min_grid = 2 if is_v7 else 1                 # keep both v7x TensorCores busy

    TB = _pick_tb(B, L, vmem_budget=int(vmem_limit * 0.8), min_grid=min_grid)
    grid = (B // TB,)
    R = TB * L

    def full(shape):
        nd = len(shape)
        return pl.BlockSpec(shape, lambda i, _n=nd: (0,) * _n)

    kernel = functools.partial(encoder_block_kernel, use_bf16_exp=use_bf16_exp)

    out = pl.pallas_call(
        kernel,
        out_shape=jax.ShapeDtypeStruct((B, L, DP), jnp.bfloat16),
        grid=grid,
        in_specs=[
            pl.BlockSpec((TB, L, DP), lambda i: (i, 0, 0)),    # x (lane-padded)
            full((L, DP)),                                     # positional signal
            pl.BlockSpec((TB, 1, L), lambda i: (i, 0, 0)),     # key mask
            full((CONV_NUM, DP)), full((CONV_NUM, DP)),        # conv LayerNorm gamma/beta
            full((CONV_NUM, DP)),                              # depthwise per-channel scales
            full((CONV_NUM, DP, DP)), full((CONV_NUM, DP)),    # pointwise W^T (bf16), bias
            full((4, DP)),                                     # norm_1/norm_2 gamma, beta
            full((DP, 3 * NH * DHP)),                          # fused per-head QKV W (bf16)
            full((2, DP, DP)), full((2, DP)),                  # FFN_1/FFN_2 W^T (bf16), bias
        ],
        out_specs=pl.BlockSpec((TB, L, DP), lambda i: (i, 0, 0)),
        scratch_shapes=[pltpu.VMEM((R, DP), jnp.float32)],     # head-concat "att" buffer
        compiler_params=pltpu.CompilerParams(
            dimension_semantics=("parallel",),
            vmem_limit_bytes=vmem_limit),
    )(x, pos, mask3,
      kp["lnc_g"], kp["lnc_b"], kp["dw"], kp["pw_w"], kp["pw_b"],
      kp["ln12"], kp["wqkv"], kp["ffn_w"], kp["ffn_b"])

    # Un-pad / transpose on the bf16 tensor, then restore f32 output contract.
    return jnp.transpose(out[:, :, :D], (0, 2, 1)).astype(jnp.float32)


def encoder_block_ref(x_ncl, mask, p):
    """Pure-JAX f32 reference of the same forward (for correctness check)."""
    B, _, L = x_ncl.shape
    x = jnp.transpose(x_ncl, (0, 2, 1)).astype(jnp.float32)
    h = x + timing_signal(L, D)[None]
    maskf = mask.astype(jnp.float32)
    for i in range(CONV_NUM):
        t = _ln_ref(h, p["lnc_g"][i], p["lnc_b"][i])
        t = t * p["dw"][i]
        h = jax.nn.relu(t @ p["pw_w"][i] + p["pw_b"][i])
    l1 = _ln_ref(h, p["ln12"][0], p["ln12"][1])
    mem = l1 @ p["w_mem"]
    q = l1 @ p["w_q"]
    K = mem[..., :D].reshape(B, L, NH, DH).transpose(0, 2, 1, 3)
    V = mem[..., D:].reshape(B, L, NH, DH).transpose(0, 2, 1, 3)
    Q = q.reshape(B, L, NH, DH).transpose(0, 2, 1, 3) * DH ** (-0.5)
    logits = jnp.einsum("bhqd,bhkd->bhqk", Q, K)
    logits = logits + (-1e30) * (1.0 - maskf)[:, None, None, :]
    w = jax.nn.softmax(logits, axis=-1)
    att = jnp.einsum("bhqk,bhkd->bhqd", w, V).transpose(0, 2, 1, 3).reshape(B, L, D)
    l2 = _ln_ref(att, p["ln12"][2], p["ln12"][3])
    f1 = jax.nn.relu(l2 @ p["ffn_w"][0] + p["ffn_b"][0])
    f2 = f1 @ p["ffn_w"][1] + p["ffn_b"][1]
    return jnp.transpose(f2, (0, 2, 1))


def init_params(key):
    """Deterministic synthetic parameters (shapes match the PyTorch __init__;
    conv weights are stored pre-transposed as [in, out] for x @ W)."""
    ks = jax.random.split(key, 13)
    s = 0.1
    p = {
        "lnc_g": 1.0 + s * jax.random.normal(ks[0], (CONV_NUM, D), jnp.float32),
        "lnc_b": s * jax.random.normal(ks[1], (CONV_NUM, D), jnp.float32),
        # depthwise_conv weight [D, 1, 1] per layer -> flattened per-channel scale
        "dw": s * jax.random.normal(ks[2], (CONV_NUM, D), jnp.float32),
        # pointwise_conv weight [D, D, 1] -> W^T : [in, out]
        "pw_w": s * jax.random.normal(ks[3], (CONV_NUM, D, D), jnp.float32),
        "pw_b": s * jax.random.normal(ks[4], (CONV_NUM, D), jnp.float32),
        # rows: norm_1.gamma, norm_1.beta, norm_2.gamma, norm_2.beta
        "ln12": jnp.concatenate([
            1.0 + s * jax.random.normal(ks[5], (1, D), jnp.float32),
            s * jax.random.normal(ks[6], (1, D), jnp.float32),
            1.0 + s * jax.random.normal(ks[7], (1, D), jnp.float32),
            s * jax.random.normal(ks[8], (1, D), jnp.float32)], axis=0),
        # mem_conv weight [2D, D, 1] -> W^T : [D, 2D]; query_conv [D, D, 1] -> [D, D]
        "w_mem": s * jax.random.normal(ks[9], (D, 2 * D), jnp.float32),
        "w_q": s * jax.random.normal(ks[10], (D, D), jnp.float32),
        # FFN_1 / FFN_2 weights [D, D, 1] -> W^T, with biases
        "ffn_w": s * jax.random.normal(ks[11], (2, D, D), jnp.float32),
        "ffn_b": s * jax.random.normal(ks[12], (2, D), jnp.float32),
    }
    return p


if __name__ == "__main__":
    key = jax.random.PRNGKey(0)
    kx, kp = jax.random.split(key)
    B, L = 2, 8
    x = jax.random.normal(kx, (B, D, L), jnp.float32)          # PyTorch NCL layout
    lens = jnp.array([L, 5])
    mask = (jnp.arange(L)[None, :] < lens[:, None]).astype(jnp.float32)  # [B, L]
    params = init_params(kp)

    out = jax.jit(encoder_block_forward)(x, mask, params)
    out = jax.block_until_ready(out)
    assert out.shape == (B, D, L)

    ref = encoder_block_ref(x, mask, params)
    err = float(jnp.max(jnp.abs(out - ref)))
    # bf16 MXU operands, bf16 output store and approx-reciprocal softmax ->
    # compare against the pure f32 reference with a correspondingly looser tol.
    if not jnp.allclose(out, ref, rtol=3e-2, atol=3e-2):
        raise SystemExit(f"mismatch vs reference, max abs err = {err}")
    print("KERNEL_OK")
</pallas_src>

<mosaic_0001>
module attributes {stable_mosaic.version = 11 : i64} {
  func.func @encoder_block_kernel(%arg0: i32, %arg1: memref<2x8x128xf32, #tpu.memory_space<vmem>>, %arg2: memref<8x128xf32, #tpu.memory_space<vmem>>, %arg3: memref<2x1x8xf32, #tpu.memory_space<vmem>>, %arg4: memref<4x128xf32, #tpu.memory_space<vmem>>, %arg5: memref<4x128xf32, #tpu.memory_space<vmem>>, %arg6: memref<4x128xf32, #tpu.memory_space<vmem>>, %arg7: memref<4x128x128xbf16, #tpu.memory_space<vmem>>, %arg8: memref<4x128xf32, #tpu.memory_space<vmem>>, %arg9: memref<4x128xf32, #tpu.memory_space<vmem>>, %arg10: memref<128x384xbf16, #tpu.memory_space<vmem>>, %arg11: memref<2x128x128xbf16, #tpu.memory_space<vmem>>, %arg12: memref<2x128xf32, #tpu.memory_space<vmem>>, %arg13: memref<2x8x128xbf16, #tpu.memory_space<vmem>>, %arg14: memref<16x128xf32, #tpu.memory_space<vmem>>) attributes {dimension_semantics = [#tpu.dimension_semantics<parallel>], iteration_bounds = array<i64: 1>, scalar_prefetch = 0 : i64, scratch_operands = 1 : i64, tpu.core_type = #tpu.core_type<tc>, window_params = [{transform_indices = @transform_0, window_bounds = array<i64: 2, 8, 128>}, {pipeline_mode = #tpu.pipeline_mode<synchronous>, transform_indices = @transform_1, window_bounds = array<i64: 8, 128>}, {transform_indices = @transform_2, window_bounds = array<i64: 2, 1, 8>}, {pipeline_mode = #tpu.pipeline_mode<synchronous>, transform_indices = @transform_3, window_bounds = array<i64: 4, 128>}, {pipeline_mode = #tpu.pipeline_mode<synchronous>, transform_indices = @transform_4, window_bounds = array<i64: 4, 128>}, {pipeline_mode = #tpu.pipeline_mode<synchronous>, transform_indices = @transform_5, window_bounds = array<i64: 4, 128>}, {pipeline_mode = #tpu.pipeline_mode<synchronous>, transform_indices = @transform_6, window_bounds = array<i64: 4, 128, 128>}, {pipeline_mode = #tpu.pipeline_mode<synchronous>, transform_indices = @transform_7, window_bounds = array<i64: 4, 128>}, {pipeline_mode = #tpu.pipeline_mode<synchronous>, transform_indices = @transform_8, window_bounds = array<i64: 4, 128>}, {pipeline_mode = #tpu.pipeline_mode<synchronous>, transform_indices = @transform_9, window_bounds = array<i64: 128, 384>}, {pipeline_mode = #tpu.pipeline_mode<synchronous>, transform_indices = @transform_10, window_bounds = array<i64: 2, 128, 128>}, {pipeline_mode = #tpu.pipeline_mode<synchronous>, transform_indices = @transform_11, window_bounds = array<i64: 2, 128>}, {transform_indices = @transform_12, window_bounds = array<i64: 2, 8, 128>}]} {
    %c0 = arith.constant 0 : index
    %c0_0 = arith.constant 0 : index
    %c0_1 = arith.constant 0 : index
    %0 = vector.load %arg1[%c0, %c0_0, %c0_1] : memref<2x8x128xf32, #tpu.memory_space<vmem>>, vector<2x8x128xf32>
    %c0_2 = arith.constant 0 : index
    %c0_3 = arith.constant 0 : index
    %1 = vector.load %arg2[%c0_2, %c0_3] : memref<8x128xf32, #tpu.memory_space<vmem>>, vector<8x128xf32>
    %2 = vector.shape_cast %1 : vector<8x128xf32> to vector<1x8x128xf32>
    %3 = vector.broadcast %2 : vector<1x8x128xf32> to vector<2x8x128xf32>
    %4 = arith.addf %0, %3 : vector<2x8x128xf32>
    %5 = vector.shape_cast %4 : vector<2x8x128xf32> to vector<16x128xf32>
    %c0_4 = arith.constant 0 : index
    %c0_5 = arith.constant 0 : index
    %c0_6 = arith.constant 0 : index
    %6 = vector.load %arg3[%c0_4, %c0_5, %c0_6] : memref<2x1x8xf32, #tpu.memory_space<vmem>>, vector<2x1x8xf32>
    %cst = arith.constant 1.000000e+00 : f32
    %7 = vector.broadcast %cst : f32 to vector<2x1x8xf32>
    %8 = arith.subf %7, %6 : vector<2x1x8xf32>
    %cst_7 = arith.constant -1.000000e+30 : f32
    %9 = vector.broadcast %cst_7 : f32 to vector<2x1x8xf32>
    %10 = arith.mulf %9, %8 : vector<2x1x8xf32>
    %c0_8 = arith.constant 0 : index
    %c0_9 = arith.constant 0 : index
    %11 = vector.load %arg4[%c0_8, %c0_9] : memref<4x128xf32, #tpu.memory_space<vmem>>, vector<1x128xf32>
    %c0_10 = arith.constant 0 : index
    %c0_11 = arith.constant 0 : index
    %12 = vector.load %arg5[%c0_10, %c0_11] : memref<4x128xf32, #tpu.memory_space<vmem>>, vector<1x128xf32>
    %cst_12 = arith.constant dense<0.000000e+00> : vector<16xf32>
    %13 = vector.multi_reduction <add>, %5, %cst_12 [1] : vector<16x128xf32> to vector<16xf32>
    %14 = vector.shape_cast %13 : vector<16xf32> to vector<16x1xf32>
    %cst_13 = arith.constant 0.010416667 : f32
    %15 = vector.broadcast %cst_13 : f32 to vector<16x1xf32>
    %16 = arith.mulf %14, %15 : vector<16x1xf32>
    %17 = arith.mulf %5, %5 : vector<16x128xf32>
    %cst_14 = arith.constant dense<0.000000e+00> : vector<16xf32>
    %18 = vector.multi_reduction <add>, %17, %cst_14 [1] : vector<16x128xf32> to vector<16xf32>
    %19 = vector.shape_cast %18 : vector<16xf32> to vector<16x1xf32>
    %cst_15 = arith.constant 0.010416667 : f32
    %20 = vector.broadcast %cst_15 : f32 to vector<16x1xf32>
    %21 = arith.mulf %19, %20 : vector<16x1xf32>
    %22 = arith.mulf %16, %16 : vector<16x1xf32>
    %23 = arith.subf %21, %22 : vector<16x1xf32>
    %cst_16 = arith.constant 0.000000e+00 : f32
    %24 = vector.broadcast %cst_16 : f32 to vector<16x1xf32>
    %25 = arith.maximumf %23, %24 : vector<16x1xf32>
    %26 = vector.broadcast %16 : vector<16x1xf32> to vector<16x128xf32>
    %27 = arith.subf %5, %26 : vector<16x128xf32>
    %cst_17 = arith.constant 9.99999974E-6 : f32
    %28 = vector.broadcast %cst_17 : f32 to vector<16x1xf32>
    %29 = arith.addf %25, %28 : vector<16x1xf32>
    %30 = math.rsqrt %29 : vector<16x1xf32>
    %31 = vector.broadcast %30 : vector<16x1xf32> to vector<16x128xf32>
    %32 = arith.mulf %27, %31 : vector<16x128xf32>
    %33 = vector.broadcast %11 : vector<1x128xf32> to vector<16x128xf32>
    %34 = arith.mulf %32, %33 : vector<16x128xf32>
    %35 = vector.broadcast %12 : vector<1x128xf32> to vector<16x128xf32>
    %36 = arith.addf %34, %35 : vector<16x128xf32>
    %c0_18 = arith.constant 0 : index
    %c0_19 = arith.constant 0 : index
    %37 = vector.load %arg6[%c0_18, %c0_19] : memref<4x128xf32, #tpu.memory_space<vmem>>, vector<1x128xf32>
    %38 = vector.broadcast %37 : vector<1x128xf32> to vector<16x128xf32>
    %39 = arith.mulf %36, %38 : vector<16x128xf32>
    %40 = arith.truncf %39 : vector<16x128xf32> to vector<16x128xbf16>
    %c0_20 = arith.constant 0 : index
    %c0_21 = arith.constant 0 : index
    %c0_22 = arith.constant 0 : index
    %41 = vector.load %arg7[%c0_20, %c0_21, %c0_22] : memref<4x128x128xbf16, #tpu.memory_space<vmem>>, vector<1x128x128xbf16>
    %42 = vector.shape_cast %41 : vector<1x128x128xbf16> to vector<128x128xbf16>
    %cst_23 = arith.constant dense<0.000000e+00> : vector<16x128xf32>
    %43 = tpu.matmul %40, %42, %cst_23 {dimension_numbers = #tpu.dot_dimension_numbers<[1], [0], [0], [1], [0, 0, 1, 1], [], []>} : vector<16x128xbf16>, vector<128x128xbf16>, vector<16x128xf32> -> vector<16x128xf32>
    %c0_24 = arith.constant 0 : index
    %c0_25 = arith.constant 0 : index
    %44 = vector.load %arg8[%c0_24, %c0_25] : memref<4x128xf32, #tpu.memory_space<vmem>>, vector<1x128xf32>
    %45 = vector.broadcast %44 : vector<1x128xf32> to vector<16x128xf32>
    %46 = arith.addf %43, %45 : vector<16x128xf32>
    %cst_26 = arith.constant 0.000000e+00 : f32
    %47 = vector.broadcast %cst_26 : f32 to vector<16x128xf32>
    %48 = arith.maximumf %46, %47 : vector<16x128xf32>
    %c1 = arith.constant 1 : index
    %c0_27 = arith.constant 0 : index
    %49 = vector.load %arg4[%c1, %c0_27] : memref<4x128xf32, #tpu.memory_space<vmem>>, vector<1x128xf32>
    %c1_28 = arith.constant 1 : index
    %c0_29 = arith.constant 0 : index
    %50 = vector.load %arg5[%c1_28, %c0_29] : memref<4x128xf32, #tpu.memory_space<vmem>>, vector<1x128xf32>
    %cst_30 = arith.constant dense<0.000000e+00> : vector<16xf32>
    %51 = vector.multi_reduction <add>, %48, %cst_30 [1] : vector<16x128xf32> to vector<16xf32>
    %52 = vector.shape_cast %51 : vector<16xf32> to vector<16x1xf32>
    %cst_31 = arith.constant 0.010416667 : f32
    %53 = vector.broadcast %cst_31 : f32 to vector<16x1xf32>
    %54 = arith.mulf %52, %53 : vector<16x1xf32>
    %55 = arith.mulf %48, %48 : vector<16x128xf32>
    %cst_32 = arith.constant dense<0.000000e+00> : vector<16xf32>
    %56 = vector.multi_reduction <add>, %55, %cst_32 [1] : vector<16x128xf32> to vector<16xf32>
    %57 = vector.shape_cast %56 : vector<16xf32> to vector<16x1xf32>
    %cst_33 = arith.constant 0.010416667 : f32
    %58 = vector.broadcast %cst_33 : f32 to vector<16x1xf32>
    %59 = arith.mulf %57, %58 : vector<16x1xf32>
    %60 = arith.mulf %54, %54 : vector<16x1xf32>
    %61 = arith.subf %59, %60 : vector<16x1xf32>
    %cst_34 = arith.constant 0.000000e+00 : f32
    %62 = vector.broadcast %cst_34 : f32 to vector<16x1xf32>
    %63 = arith.maximumf %61, %62 : vector<16x1xf32>
    %64 = vector.broadcast %54 : vector<16x1xf32> to vector<16x128xf32>
    %65 = arith.subf %48, %64 : vector<16x128xf32>
    %cst_35 = arith.constant 9.99999974E-6 : f32
    %66 = vector.broadcast %cst_35 : f32 to vector<16x1xf32>
    %67 = arith.addf %63, %66 : vector<16x1xf32>
    %68 = math.rsqrt %67 : vector<16x1xf32>
    %69 = vector.broadcast %68 : vector<16x1xf32> to vector<16x128xf32>
    %70 = arith.mulf %65, %69 : vector<16x128xf32>
    %71 = vector.broadcast %49 : vector<1x128xf32> to vector<16x128xf32>
    %72 = arith.mulf %70, %71 : vector<16x128xf32>
    %73 = vector.broadcast %50 : vector<1x128xf32> to vector<16x128xf32>
    %74 = arith.addf %72, %73 : vector<16x128xf32>
    %c1_36 = arith.constant 1 : index
    %c0_37 = arith.constant 0 : index
    %75 = vector.load %arg6[%c1_36, %c0_37] : memref<4x128xf32, #tpu.memory_space<vmem>>, vector<1x128xf32>
    %76 = vector.broadcast %75 : vector<1x128xf32> to vector<16x128xf32>
    %77 = arith.mulf %74, %76 : vector<16x128xf32>
    %78 = arith.truncf %77 : vector<16x128xf32> to vector<16x128xbf16>
    %c1_38 = arith.constant 1 : index
    %c0_39 = arith.constant 0 : index
    %c0_40 = arith.constant 0 : index
    %79 = vector.load %arg7[%c1_38, %c0_39, %c0_40] : memref<4x128x128xbf16, #tpu.memory_space<vmem>>, vector<1x128x128xbf16>
    %80 = vector.shape_cast %79 : vector<1x128x128xbf16> to vector<128x128xbf16>
    %cst_41 = arith.constant dense<0.000000e+00> : vector<16x128xf32>
    %81 = tpu.matmul %78, %80, %cst_41 {dimension_numbers = #tpu.dot_dimension_numbers<[1], [0], [0], [1], [0, 0, 1, 1], [], []>} : vector<16x128xbf16>, vector<128x128xbf16>, vector<16x128xf32> -> vector<16x128xf32>
    %c1_42 = arith.constant 1 : index
    %c0_43 = arith.constant 0 : index
    %82 = vector.load %arg8[%c1_42, %c0_43] : memref<4x128xf32, #tpu.memory_space<vmem>>, vector<1x128xf32>
    %83 = vector.broadcast %82 : vector<1x128xf32> to vector<16x128xf32>
    %84 = arith.addf %81, %83 : vector<16x128xf32>
    %cst_44 = arith.constant 0.000000e+00 : f32
    %85 = vector.broadcast %cst_44 : f32 to vector<16x128xf32>
    %86 = arith.maximumf %84, %85 : vector<16x128xf32>
    %c2 = arith.constant 2 : index
    %c0_45 = arith.constant 0 : index
    %87 = vector.load %arg4[%c2, %c0_45] : memref<4x128xf32, #tpu.memory_space<vmem>>, vector<1x128xf32>
    %c2_46 = arith.constant 2 : index
    %c0_47 = arith.constant 0 : index
    %88 = vector.load %arg5[%c2_46, %c0_47] : memref<4x128xf32, #tpu.memory_space<vmem>>, vector<1x128xf32>
    %cst_48 = arith.constant dense<0.000000e+00> : vector<16xf32>
    %89 = vector.multi_reduction <add>, %86, %cst_48 [1] : vector<16x128xf32> to vector<16xf32>
    %90 = vector.shape_cast %89 : vector<16xf32> to vector<16x1xf32>
    %cst_49 = arith.constant 0.010416667 : f32
    %91 = vector.broadcast %cst_49 : f32 to vector<16x1xf32>
    %92 = arith.mulf %90, %91 : vector<16x1xf32>
    %93 = arith.mulf %86, %86 : vector<16x128xf32>
    %cst_50 = arith.constant dense<0.000000e+00> : vector<16xf32>
    %94 = vector.multi_reduction <add>, %93, %cst_50 [1] : vector<16x128xf32> to vector<16xf32>
    %95 = vector.shape_cast %94 : vector<16xf32> to vector<16x1xf32>
    %cst_51 = arith.constant 0.010416667 : f32
    %96 = vector.broadcast %cst_51 : f32 to vector<16x1xf32>
    %97 = arith.mulf %95, %96 : vector<16x1xf32>
    %98 = arith.mulf %92, %92 : vector<16x1xf32>
    %99 = arith.subf %97, %98 : vector<16x1xf32>
    %cst_52 = arith.constant 0.000000e+00 : f32
    %100 = vector.broadcast %cst_52 : f32 to vector<16x1xf32>
    %101 = arith.maximumf %99, %100 : vector<16x1xf32>
    %102 = vector.broadcast %92 : vector<16x1xf32> to vector<16x128xf32>
    %103 = arith.subf %86, %102 : vector<16x128xf32>
    %cst_53 = arith.constant 9.99999974E-6 : f32
    %104 = vector.broadcast %cst_53 : f32 to vector<16x1xf32>
    %105 = arith.addf %101, %104 : vector<16x1xf32>
    %106 = math.rsqrt %105 : vector<16x1xf32>
    %107 = vector.broadcast %106 : vector<16x1xf32> to vector<16x128xf32>
    %108 = arith.mulf %103, %107 : vector<16x128xf32>
    %109 = vector.broadcast %87 : vector<1x128xf32> to vector<16x128xf32>
    %110 = arith.mulf %108, %109 : vector<16x128xf32>
    %111 = vector.broadcast %88 : vector<1x128xf32> to vector<16x128xf32>
    %112 = arith.addf %110, %111 : vector<16x128xf32>
    %c2_54 = arith.constant 2 : index
    %c0_55 = arith.constant 0 : index
    %113 = vector.load %arg6[%c2_54, %c0_55] : memref<4x128xf32, #tpu.memory_space<vmem>>, vector<1x128xf32>
    %114 = vector.broadcast %113 : vector<1x128xf32> to vector<16x128xf32>
    %115 = arith.mulf %112, %114 : vector<16x128xf32>
    %116 = arith.truncf %115 : vector<16x128xf32> to vector<16x128xbf16>
    %c2_56 = arith.constant 2 : index
    %c0_57 = arith.constant 0 : index
    %c0_58 = arith.constant 0 : index
    %117 = vector.load %arg7[%c2_56, %c0_57, %c0_58] : memref<4x128x128xbf16, #tpu.memory_space<vmem>>, vector<1x128x128xbf16>
    %118 = vector.shape_cast %117 : vector<1x128x128xbf16> to vector<128x128xbf16>
    %cst_59 = arith.constant dense<0.000000e+00> : vector<16x128xf32>
    %119 = tpu.matmul %116, %118, %cst_59 {dimension_numbers = #tpu.dot_dimension_numbers<[1], [0], [0], [1], [0, 0, 1, 1], [], []>} : vector<16x128xbf16>, vector<128x128xbf16>, vector<16x128xf32> -> vector<16x128xf32>
    %c2_60 = arith.constant 2 : index
    %c0_61 = arith.constant 0 : index
    %120 = vector.load %arg8[%c2_60, %c0_61] : memref<4x128xf32, #tpu.memory_space<vmem>>, vector<1x128xf32>
    %121 = vector.broadcast %120 : vector<1x128xf32> to vector<16x128xf32>
    %122 = arith.addf %119, %121 : vector<16x128xf32>
    %cst_62 = arith.constant 0.000000e+00 : f32
    %123 = vector.broadcast %cst_62 : f32 to vector<16x128xf32>
    %124 = arith.maximumf %122, %123 : vector<16x128xf32>
    %c3 = arith.constant 3 : index
    %c0_63 = arith.constant 0 : index
    %125 = vector.load %arg4[%c3, %c0_63] : memref<4x128xf32, #tpu.memory_space<vmem>>, vector<1x128xf32>
    %c3_64 = arith.constant 3 : index
    %c0_65 = arith.constant 0 : index
    %126 = vector.load %arg5[%c3_64, %c0_65] : memref<4x128xf32, #tpu.memory_space<vmem>>, vector<1x128xf32>
    %cst_66 = arith.constant dense<0.000000e+00> : vector<16xf32>
    %127 = vector.multi_reduction <add>, %124, %cst_66 [1] : vector<16x128xf32> to vector<16xf32>
    %128 = vector.shape_cast %127 : vector<16xf32> to vector<16x1xf32>
    %cst_67 = arith.constant 0.010416667 : f32
    %129 = vector.broadcast %cst_67 : f32 to vector<16x1xf32>
    %130 = arith.mulf %128, %129 : vector<16x1xf32>
    %131 = arith.mulf %124, %124 : vector<16x128xf32>
    %cst_68 = arith.constant dense<0.000000e+00> : vector<16xf32>
    %132 = vector.multi_reduction <add>, %131, %cst_68 [1] : vector<16x128xf32> to vector<16xf32>
    %133 = vector.shape_cast %132 : vector<16xf32> to vector<16x1xf32>
    %cst_69 = arith.constant 0.010416667 : f32
    %134 = vector.broadcast %cst_69 : f32 to vector<16x1xf32>
    %135 = arith.mulf %133, %134 : vector<16x1xf32>
    %136 = arith.mulf %130, %130 : vector<16x1xf32>
    %137 = arith.subf %135, %136 : vector<16x1xf32>
    %cst_70 = arith.constant 0.000000e+00 : f32
    %138 = vector.broadcast %cst_70 : f32 to vector<16x1xf32>
    %139 = arith.maximumf %137, %138 : vector<16x1xf32>
    %140 = vector.broadcast %130 : vector<16x1xf32> to vector<16x128xf32>
    %141 = arith.subf %124, %140 : vector<16x128xf32>
    %cst_71 = arith.constant 9.99999974E-6 : f32
    %142 = vector.broadcast %cst_71 : f32 to vector<16x1xf32>
    %143 = arith.addf %139, %142 : vector<16x1xf32>
    %144 = math.rsqrt %143 : vector<16x1xf32>
    %145 = vector.broadcast %144 : vector<16x1xf32> to vector<16x128xf32>
    %146 = arith.mulf %141, %145 : vector<16x128xf32>
    %147 = vector.broadcast %125 : vector<1x128xf32> to vector<16x128xf32>
    %148 = arith.mulf %146, %147 : vector<16x128xf32>
    %149 = vector.broadcast %126 : vector<1x128xf32> to vector<16x128xf32>
    %150 = arith.addf %148, %149 : vector<16x128xf32>
    %c3_72 = arith.constant 3 : index
    %c0_73 = arith.constant 0 : index
    %151 = vector.load %arg6[%c3_72, %c0_73] : memref<4x128xf32, #tpu.memory_space<vmem>>, vector<1x128xf32>
    %152 = vector.broadcast %151 : vector<1x128xf32> to vector<16x128xf32>
    %153 = arith.mulf %150, %152 : vector<16x128xf32>
    %154 = arith.truncf %153 : vector<16x128xf32> to vector<16x128xbf16>
    %c3_74 = arith.constant 3 : index
    %c0_75 = arith.constant 0 : index
    %c0_76 = arith.constant 0 : index
    %155 = vector.load %arg7[%c3_74, %c0_75, %c0_76] : memref<4x128x128xbf16, #tpu.memory_space<vmem>>, vector<1x128x128xbf16>
    %156 = vector.shape_cast %155 : vector<1x128x128xbf16> to vector<128x128xbf16>
    %cst_77 = arith.constant dense<0.000000e+00> : vector<16x128xf32>
    %157 = tpu.matmul %154, %156, %cst_77 {dimension_numbers = #tpu.dot_dimension_numbers<[1], [0], [0], [1], [0, 0, 1, 1], [], []>} : vector<16x128xbf16>, vector<128x128xbf16>, vector<16x128xf32> -> vector<16x128xf32>
    %c3_78 = arith.constant 3 : index
    %c0_79 = arith.constant 0 : index
    %158 = vector.load %arg8[%c3_78, %c0_79] : memref<4x128xf32, #tpu.memory_space<vmem>>, vector<1x128xf32>
    %159 = vector.broadcast %158 : vector<1x128xf32> to vector<16x128xf32>
    %160 = arith.addf %157, %159 : vector<16x128xf32>
    %cst_80 = arith.constant 0.000000e+00 : f32
    %161 = vector.broadcast %cst_80 : f32 to vector<16x128xf32>
    %162 = arith.maximumf %160, %161 : vector<16x128xf32>
    %c0_81 = arith.constant 0 : index
    %c0_82 = arith.constant 0 : index
    %163 = vector.load %arg9[%c0_81, %c0_82] : memref<4x128xf32, #tpu.memory_space<vmem>>, vector<1x128xf32>
    %c1_83 = arith.constant 1 : index
    %c0_84 = arith.constant 0 : index
    %164 = vector.load %arg9[%c1_83, %c0_84] : memref<4x128xf32, #tpu.memory_space<vmem>>, vector<1x128xf32>
    %cst_85 = arith.constant dense<0.000000e+00> : vector<16xf32>
    %165 = vector.multi_reduction <add>, %162, %cst_85 [1] : vector<16x128xf32> to vector<16xf32>
    %166 = vector.shape_cast %165 : vector<16xf32> to vector<16x1xf32>
    %cst_86 = arith.constant 0.010416667 : f32
    %167 = vector.broadcast %cst_86 : f32 to vector<16x1xf32>
    %168 = arith.mulf %166, %167 : vector<16x1xf32>
    %169 = arith.mulf %162, %162 : vector<16x128xf32>
    %cst_87 = arith.constant dense<0.000000e+00> : vector<16xf32>
    %170 = vector.multi_reduction <add>, %169, %cst_87 [1] : vector<16x128xf32> to vector<16xf32>
    %171 = vector.shape_cast %170 : vector<16xf32> to vector<16x1xf32>
    %cst_88 = arith.constant 0.010416667 : f32
    %172 = vector.broadcast %cst_88 : f32 to vector<16x1xf32>
    %173 = arith.mulf %171, %172 : vector<16x1xf32>
    %174 = arith.mulf %168, %168 : vector<16x1xf32>
    %175 = arith.subf %173, %174 : vector<16x1xf32>
    %cst_89 = arith.constant 0.000000e+00 : f32
    %176 = vector.broadcast %cst_89 : f32 to vector<16x1xf32>
    %177 = arith.maximumf %175, %176 : vector<16x1xf32>
    %178 = vector.broadcast %168 : vector<16x1xf32> to vector<16x128xf32>
    %179 = arith.subf %162, %178 : vector<16x128xf32>
    %cst_90 = arith.constant 9.99999974E-6 : f32
    %180 = vector.broadcast %cst_90 : f32 to vector<16x1xf32>
    %181 = arith.addf %177, %180 : vector<16x1xf32>
    %182 = math.rsqrt %181 : vector<16x1xf32>
    %183 = vector.broadcast %182 : vector<16x1xf32> to vector<16x128xf32>
    %184 = arith.mulf %179, %183 : vector<16x128xf32>
    %185 = vector.broadcast %163 : vector<1x128xf32> to vector<16x128xf32>
    %186 = arith.mulf %184, %185 : vector<16x128xf32>
    %187 = vector.broadcast %164 : vector<1x128xf32> to vector<16x128xf32>
    %188 = arith.addf %186, %187 : vector<16x128xf32>
    %189 = arith.truncf %188 : vector<16x128xf32> to vector<16x128xbf16>
    %c0_91 = arith.constant 0 : index
    %c0_92 = arith.constant 0 : index
    %190 = vector.load %arg10[%c0_91, %c0_92] : memref<128x384xbf16, #tpu.memory_space<vmem>>, vector<128x384xbf16>
    %cst_93 = arith.constant dense<0.000000e+00> : vector<16x384xf32>
    %191 = tpu.matmul %189, %190, %cst_93 {dimension_numbers = #tpu.dot_dimension_numbers<[1], [0], [0], [1], [0, 0, 1, 1], [], []>} : vector<16x128xbf16>, vector<128x384xbf16>, vector<16x384xf32> -> vector<16x384xf32>
    %192 = arith.truncf %191 : vector<16x384xf32> to vector<16x384xbf16>
    %193 = vector.extract_strided_slice %192 {offsets = [0, 0], sizes = [16, 64], strides = [1, 1]} : vector<16x384xbf16> to vector<16x64xbf16>
    %194 = vector.shape_cast %193 : vector<16x64xbf16> to vector<2x8x64xbf16>
    %195 = vector.extract_strided_slice %192 {offsets = [0, 64], sizes = [16, 64], strides = [1, 1]} : vector<16x384xbf16> to vector<16x64xbf16>
    %196 = vector.shape_cast %195 : vector<16x64xbf16> to vector<2x8x64xbf16>
    %197 = vector.extract_strided_slice %192 {offsets = [0, 128], sizes = [16, 64], strides = [1, 1]} : vector<16x384xbf16> to vector<16x64xbf16>
    %198 = vector.shape_cast %197 : vector<16x64xbf16> to vector<2x8x64xbf16>
    %cst_94 = arith.constant dense<0.000000e+00> : vector<2x8x8xf32>
    %199 = tpu.matmul %194, %196, %cst_94 {dimension_numbers = #tpu.dot_dimension_numbers<[2], [2], [1], [1], [0, 0, 0, 1, 1, 1], [0], [0]>} : vector<2x8x64xbf16>, vector<2x8x64xbf16>, vector<2x8x8xf32> -> vector<2x8x8xf32>
    %200 = vector.broadcast %10 : vector<2x1x8xf32> to vector<2x8x8xf32>
    %201 = arith.addf %199, %200 : vector<2x8x8xf32>
    %cst_95 = arith.constant dense<0xFF800000> : vector<2x8xf32>
    %202 = vector.multi_reduction <maximumf>, %201, %cst_95 [2] : vector<2x8x8xf32> to vector<2x8xf32>
    %203 = vector.shape_cast %202 : vector<2x8xf32> to vector<2x8x1xf32>
    %204 = vector.broadcast %203 : vector<2x8x1xf32> to vector<2x8x8xf32>
    %205 = arith.subf %201, %204 : vector<2x8x8xf32>
    %206 = math.exp %205 : vector<2x8x8xf32>
    %cst_96 = arith.constant dense<0.000000e+00> : vector<2x8xf32>
    %207 = vector.multi_reduction <add>, %206, %cst_96 [2] : vector<2x8x8xf32> to vector<2x8xf32>
    %208 = vector.shape_cast %207 : vector<2x8xf32> to vector<2x8x1xf32>
    %209 = tpu.reciprocal %208 {approx = true} : vector<2x8x1xf32> -> vector<2x8x1xf32>
    %210 = vector.broadcast %209 : vector<2x8x1xf32> to vector<2x8x8xf32>
    %211 = arith.mulf %206, %210 : vector<2x8x8xf32>
    %212 = arith.truncf %211 : vector<2x8x8xf32> to vector<2x8x8xbf16>
    %cst_97 = arith.constant dense<0.000000e+00> : vector<2x8x64xf32>
    %213 = tpu.matmul %212, %198, %cst_97 {dimension_numbers = #tpu.dot_dimension_numbers<[2], [1], [1], [2], [0, 0, 0, 1, 1, 2], [0], [0]>} : vector<2x8x8xbf16>, vector<2x8x64xbf16>, vector<2x8x64xf32> -> vector<2x8x64xf32>
    %214 = vector.shape_cast %213 : vector<2x8x64xf32> to vector<16x64xf32>
    %c0_98 = arith.constant 0 : index
    %c0_99 = arith.constant 0 : index
    %215 = vector.load %arg14[%c0_98, %c0_99] : memref<16x128xf32, #tpu.memory_space<vmem>>, vector<16x64xf32>
    tpu.vector_store %arg14[%c0_98, %c0_99], %214 {strides = array<i32>} : memref<16x128xf32, #tpu.memory_space<vmem>>, vector<16x64xf32>,
    %216 = vector.extract_strided_slice %192 {offsets = [0, 192], sizes = [16, 64], strides = [1, 1]} : vector<16x384xbf16> to vector<16x64xbf16>
    %217 = vector.shape_cast %216 : vector<16x64xbf16> to vector<2x8x64xbf16>
    %218 = vector.extract_strided_slice %192 {offsets = [0, 256], sizes = [16, 64], strides = [1, 1]} : vector<16x384xbf16> to vector<16x64xbf16>
    %219 = vector.shape_cast %218 : vector<16x64xbf16> to vector<2x8x64xbf16>
    %220 = vector.extract_strided_slice %192 {offsets = [0, 320], sizes = [16, 64], strides = [1, 1]} : vector<16x384xbf16> to vector<16x64xbf16>
    %221 = vector.shape_cast %220 : vector<16x64xbf16> to vector<2x8x64xbf16>
    %cst_100 = arith.constant dense<0.000000e+00> : vector<2x8x8xf32>
    %222 = tpu.matmul %217, %219, %cst_100 {dimension_numbers = #tpu.dot_dimension_numbers<[2], [2], [1], [1], [0, 0, 0, 1, 1, 1], [0], [0]>} : vector<2x8x64xbf16>, vector<2x8x64xbf16>, vector<2x8x8xf32> -> vector<2x8x8xf32>
    %223 = vector.broadcast %10 : vector<2x1x8xf32> to vector<2x8x8xf32>
    %224 = arith.addf %222, %223 : vector<2x8x8xf32>
    %cst_101 = arith.constant dense<0xFF800000> : vector<2x8xf32>
    %225 = vector.multi_reduction <maximumf>, %224, %cst_101 [2] : vector<2x8x8xf32> to vector<2x8xf32>
    %226 = vector.shape_cast %225 : vector<2x8xf32> to vector<2x8x1xf32>
    %227 = vector.broadcast %226 : vector<2x8x1xf32> to vector<2x8x8xf32>
    %228 = arith.subf %224, %227 : vector<2x8x8xf32>
    %229 = math.exp %228 : vector<2x8x8xf32>
    %cst_102 = arith.constant dense<0.000000e+00> : vector<2x8xf32>
    %230 = vector.multi_reduction <add>, %229, %cst_102 [2] : vector<2x8x8xf32> to vector<2x8xf32>
    %231 = vector.shape_cast %230 : vector<2x8xf32> to vector<2x8x1xf32>
    %232 = tpu.reciprocal %231 {approx = true} : vector<2x8x1xf32> -> vector<2x8x1xf32>
    %233 = vector.broadcast %232 : vector<2x8x1xf32> to vector<2x8x8xf32>
    %234 = arith.mulf %229, %233 : vector<2x8x8xf32>
    %235 = arith.truncf %234 : vector<2x8x8xf32> to vector<2x8x8xbf16>
    %cst_103 = arith.constant dense<0.000000e+00> : vector<2x8x64xf32>
    %236 = tpu.matmul %235, %221, %cst_103 {dimension_numbers = #tpu.dot_dimension_numbers<[2], [1], [1], [2], [0, 0, 0, 1, 1, 2], [0], [0]>} : vector<2x8x8xbf16>, vector<2x8x64xbf16>, vector<2x8x64xf32> -> vector<2x8x64xf32>
    %237 = vector.shape_cast %236 : vector<2x8x64xf32> to vector<16x64xf32>
    %c0_104 = arith.constant 0 : index
    %c64 = arith.constant 64 : index
    %238 = vector.load %arg14[%c0_104, %c64] : memref<16x128xf32, #tpu.memory_space<vmem>>, vector<16x64xf32>
    tpu.vector_store %arg14[%c0_104, %c64], %237 {strides = array<i32>} : memref<16x128xf32, #tpu.memory_space<vmem>>, vector<16x64xf32>,
    %c0_105 = arith.constant 0 : index
    %c0_106 = arith.constant 0 : index
    %239 = vector.load %arg14[%c0_105, %c0_106] : memref<16x128xf32, #tpu.memory_space<vmem>>, vector<16x128xf32>
    %c2_107 = arith.constant 2 : index
    %c0_108 = arith.constant 0 : index
    %240 = vector.load %arg9[%c2_107, %c0_108] : memref<4x128xf32, #tpu.memory_space<vmem>>, vector<1x128xf32>
    %c3_109 = arith.constant 3 : index
    %c0_110 = arith.constant 0 : index
    %241 = vector.load %arg9[%c3_109, %c0_110] : memref<4x128xf32, #tpu.memory_space<vmem>>, vector<1x128xf32>
    %cst_111 = arith.constant dense<0.000000e+00> : vector<16xf32>
    %242 = vector.multi_reduction <add>, %239, %cst_111 [1] : vector<16x128xf32> to vector<16xf32>
    %243 = vector.shape_cast %242 : vector<16xf32> to vector<16x1xf32>
    %cst_112 = arith.constant 0.010416667 : f32
    %244 = vector.broadcast %cst_112 : f32 to vector<16x1xf32>
    %245 = arith.mulf %243, %244 : vector<16x1xf32>
    %246 = arith.mulf %239, %239 : vector<16x128xf32>
    %cst_113 = arith.constant dense<0.000000e+00> : vector<16xf32>
    %247 = vector.multi_reduction <add>, %246, %cst_113 [1] : vector<16x128xf32> to vector<16xf32>
    %248 = vector.shape_cast %247 : vector<16xf32> to vector<16x1xf32>
    %cst_114 = arith.constant 0.010416667 : f32
    %249 = vector.broadcast %cst_114 : f32 to vector<16x1xf32>
    %250 = arith.mulf %248, %249 : vector<16x1xf32>
    %251 = arith.mulf %245, %245 : vector<16x1xf32>
    %252 = arith.subf %250, %251 : vector<16x1xf32>
    %cst_115 = arith.constant 0.000000e+00 : f32
    %253 = vector.broadcast %cst_115 : f32 to vector<16x1xf32>
    %254 = arith.maximumf %252, %253 : vector<16x1xf32>
    %255 = vector.broadcast %245 : vector<16x1xf32> to vector<16x128xf32>
    %256 = arith.subf %239, %255 : vector<16x128xf32>
    %cst_116 = arith.constant 9.99999974E-6 : f32
    %257 = vector.broadcast %cst_116 : f32 to vector<16x1xf32>
    %258 = arith.addf %254, %257 : vector<16x1xf32>
    %259 = math.rsqrt %258 : vector<16x1xf32>
    %260 = vector.broadcast %259 : vector<16x1xf32> to vector<16x128xf32>
    %261 = arith.mulf %256, %260 : vector<16x128xf32>
    %262 = vector.broadcast %240 : vector<1x128xf32> to vector<16x128xf32>
    %263 = arith.mulf %261, %262 : vector<16x128xf32>
    %264 = vector.broadcast %241 : vector<1x128xf32> to vector<16x128xf32>
    %265 = arith.addf %263, %264 : vector<16x128xf32>
    %266 = arith.truncf %265 : vector<16x128xf32> to vector<16x128xbf16>
    %c0_117 = arith.constant 0 : index
    %c0_118 = arith.constant 0 : index
    %c0_119 = arith.constant 0 : index
    %267 = vector.load %arg11[%c0_117, %c0_118, %c0_119] : memref<2x128x128xbf16, #tpu.memory_space<vmem>>, vector<1x128x128xbf16>
    %268 = vector.shape_cast %267 : vector<1x128x128xbf16> to vector<128x128xbf16>
    %cst_120 = arith.constant dense<0.000000e+00> : vector<16x128xf32>
    %269 = tpu.matmul %266, %268, %cst_120 {dimension_numbers = #tpu.dot_dimension_numbers<[1], [0], [0], [1], [0, 0, 1, 1], [], []>} : vector<16x128xbf16>, vector<128x128xbf16>, vector<16x128xf32> -> vector<16x128xf32>
    %c0_121 = arith.constant 0 : index
    %c0_122 = arith.constant 0 : index
    %270 = vector.load %arg12[%c0_121, %c0_122] : memref<2x128xf32, #tpu.memory_space<vmem>>, vector<1x128xf32>
    %271 = vector.broadcast %270 : vector<1x128xf32> to vector<16x128xf32>
    %272 = arith.addf %269, %271 : vector<16x128xf32>
    %cst_123 = arith.constant 0.000000e+00 : f32
    %273 = vector.broadcast %cst_123 : f32 to vector<16x128xf32>
    %274 = arith.maximumf %272, %273 : vector<16x128xf32>
    %275 = arith.truncf %274 : vector<16x128xf32> to vector<16x128xbf16>
    %c1_124 = arith.constant 1 : index
    %c0_125 = arith.constant 0 : index
    %c0_126 = arith.constant 0 : index
    %276 = vector.load %arg11[%c1_124, %c0_125, %c0_126] : memref<2x128x128xbf16, #tpu.memory_space<vmem>>, vector<1x128x128xbf16>
    %277 = vector.shape_cast %276 : vector<1x128x128xbf16> to vector<128x128xbf16>
    %cst_127 = arith.constant dense<0.000000e+00> : vector<16x128xf32>
    %278 = tpu.matmul %275, %277, %cst_127 {dimension_numbers = #tpu.dot_dimension_numbers<[1], [0], [0], [1], [0, 0, 1, 1], [], []>} : vector<16x128xbf16>, vector<128x128xbf16>, vector<16x128xf32> -> vector<16x128xf32>
    %c1_128 = arith.constant 1 : index
    %c0_129 = arith.constant 0 : index
    %279 = vector.load %arg12[%c1_128, %c0_129] : memref<2x128xf32, #tpu.memory_space<vmem>>, vector<1x128xf32>
    %280 = vector.broadcast %279 : vector<1x128xf32> to vector<16x128xf32>
    %281 = arith.addf %278, %280 : vector<16x128xf32>
    %282 = arith.truncf %281 : vector<16x128xf32> to vector<16x128xbf16>
    %283 = vector.shape_cast %282 : vector<16x128xbf16> to vector<2x8x128xbf16>
    %c0_130 = arith.constant 0 : index
    %c0_131 = arith.constant 0 : index
    %c0_132 = arith.constant 0 : index
    %284 = vector.load %arg13[%c0_130, %c0_131, %c0_132] : memref<2x8x128xbf16, #tpu.memory_space<vmem>>, vector<2x8x128xbf16>
    tpu.vector_store %arg13[%c0_130, %c0_131, %c0_132], %283 {strides = array<i32>} : memref<2x8x128xbf16, #tpu.memory_space<vmem>>, vector<2x8x128xbf16>,
    return
  }
  func.func @transform_0(%arg0: i32) -> (i32, i32, i32) {
    %c0_i32 = arith.constant 0 : i32
    %c0_i32_0 = arith.constant 0 : i32
    %c0_i32_1 = arith.constant 0 : i32
    return %arg0, %c0_i32, %c0_i32_0 : i32, i32, i32
  }
  func.func @transform_1(%arg0: i32) -> (i32, i32) {
    %c0_i32 = arith.constant 0 : i32
    %c0_i32_0 = arith.constant 0 : i32
    %c0_i32_1 = arith.constant 0 : i32
    return %c0_i32, %c0_i32_0 : i32, i32
  }
  func.func @transform_2(%arg0: i32) -> (i32, i32, i32) {
    %c0_i32 = arith.constant 0 : i32
    %c0_i32_0 = arith.constant 0 : i32
    %c0_i32_1 = arith.constant 0 : i32
    return %arg0, %c0_i32, %c0_i32_0 : i32, i32, i32
  }
  func.func @transform_3(%arg0: i32) -> (i32, i32) {
    %c0_i32 = arith.constant 0 : i32
    %c0_i32_0 = arith.constant 0 : i32
    %c0_i32_1 = arith.constant 0 : i32
    return %c0_i32, %c0_i32_0 : i32, i32
  }
  func.func @transform_4(%arg0: i32) -> (i32, i32) {
    %c0_i32 = arith.constant 0 : i32
    %c0_i32_0 = arith.constant 0 : i32
    %c0_i32_1 = arith.constant 0 : i32
    return %c0_i32, %c0_i32_0 : i32, i32
  }
  func.func @transform_5(%arg0: i32) -> (i32, i32) {
    %c0_i32 = arith.constant 0 : i32
    %c0_i32_0 = arith.constant 0 : i32
    %c0_i32_1 = arith.constant 0 : i32
    return %c0_i32, %c0_i32_0 : i32, i32
  }
  func.func @transform_6(%arg0: i32) -> (i32, i32, i32) {
    %c0_i32 = arith.constant 0 : i32
    %c0_i32_0 = arith.constant 0 : i32
    %c0_i32_1 = arith.constant 0 : i32
    %c0_i32_2 = arith.constant 0 : i32
    return %c0_i32, %c0_i32_0, %c0_i32_1 : i32, i32, i32
  }
  func.func @transform_7(%arg0: i32) -> (i32, i32) {
    %c0_i32 = arith.constant 0 : i32
    %c0_i32_0 = arith.constant 0 : i32
    %c0_i32_1 = arith.constant 0 : i32
    return %c0_i32, %c0_i32_0 : i32, i32
  }
  func.func @transform_8(%arg0: i32) -> (i32, i32) {
    %c0_i32 = arith.constant 0 : i32
    %c0_i32_0 = arith.constant 0 : i32
    %c0_i32_1 = arith.constant 0 : i32
    return %c0_i32, %c0_i32_0 : i32, i32
  }
  func.func @transform_9(%arg0: i32) -> (i32, i32) {
    %c0_i32 = arith.constant 0 : i32
    %c0_i32_0 = arith.constant 0 : i32
    %c0_i32_1 = arith.constant 0 : i32
    return %c0_i32, %c0_i32_0 : i32, i32
  }
  func.func @transform_10(%arg0: i32) -> (i32, i32, i32) {
    %c0_i32 = arith.constant 0 : i32
    %c0_i32_0 = arith.constant 0 : i32
    %c0_i32_1 = arith.constant 0 : i32
    %c0_i32_2 = arith.constant 0 : i32
    return %c0_i32, %c0_i32_0, %c0_i32_1 : i32, i32, i32
  }
  func.func @transform_11(%arg0: i32) -> (i32, i32) {
    %c0_i32 = arith.constant 0 : i32
    %c0_i32_0 = arith.constant 0 : i32
    %c0_i32_1 = arith.constant 0 : i32
    return %c0_i32, %c0_i32_0 : i32, i32
  }
  func.func @transform_12(%arg0: i32) -> (i32, i32, i32) {
    %c0_i32 = arith.constant 0 : i32
    %c0_i32_0 = arith.constant 0 : i32
    %c0_i32_1 = arith.constant 0 : i32
    return %arg0, %c0_i32, %c0_i32_0 : i32, i32, i32
  }
}

</mosaic_0001>

<llo_original>
// kernel: squeeze.8
$region0: #{squeeze.8}
  %s0 = inlined_call_operand.vmem [shape: f32[96], index: 0, kind: input, shape index: {}]
  %s1 = inlined_call_operand.vmem [shape: f32[2,48], index: 1, kind: output, shape index: {}]
  $region1: #{squeeze.8} parent=0
    #allocation0 [shape = 'u8[4096]{0}', space=vmem, size = 0x1000, scoped, tag = 'scoped mem for output reshape']
    #allocation1 [shape = 'u8[4096]{0}', space=vmem, size = 0x1000, scoped, tag = 'scoped mem for input reshape']
    %s3 = sshll.u32 1, 1
    %s4 = ssub.s32 %s3, 1
    %v5 = vld [vmem:[%s0] sm:%s4]
    %6 = vst [vmem:[#allocation1] sm:%s4] %v5
    %v7 = vld [vmem:[#allocation1] sm:$0x1]
    %vm8 = vcmask 392192
    %9 = vst.msk [vmem:[#allocation0] sm:$0x1] %vm8, %v7
    %v10 = vld [vmem:[#allocation1] sm:$0x1]
    %11 = vrot.lane.b32.xlu0 %v10, 80
    %v12 = vpop.permute.xlu0 %11
    %vm13 = vcmask 392192
    %s14 = scalar_lea.vmem [#allocation0], 1
    %15 = vst.msk [vmem:[%s14] sm:$0x1] %vm13, %v12
    %s17 = sshll.u32 1, 2
    %s18 = ssub.s32 %s17, 1
    %v20 = vld [vmem:[#allocation0] sm:%s18]
    %s21 = sshll.u32 1, 2
    %s22 = ssub.s32 %s21, 1
    %23 = vst [vmem:[%s1] sm:%s22] %v20

// kernel: encoder_block_forward.1
$region0: #{encoder_block_forward.1}
  #allocation0 [shape = 'u32[]', space=smem, size = 0x4, offset = 0x4, fixed_abs, tag = 'smem constant byte address 0x4 - core index']
  #allocation1 [shape = 'u32[144,128]{1,0:T(1,128)}', space=vmem, size = 0x12000, scoped, tag = 'internal scratch']
  #allocation2 [shape = 'f32[16,128]{1,0:T(8,128)}', space=vmem, size = 0x2000, scoped, tag = 'scratch operand']
  %s0 = inlined_call_operand.vmem [shape: f32[2,8,128], index: 0, kind: input, shape index: {}]
  %s1 = inlined_call_operand.vmem [shape: f32[8,128], index: 1, kind: input, shape index: {}]
  %s2 = inlined_call_operand.vmem [shape: f32[2,1,8], index: 2, kind: input, shape index: {}]
  %s3 = inlined_call_operand.vmem [shape: f32[4,128], index: 3, kind: input, shape index: {}]
  %s4 = inlined_call_operand.vmem [shape: f32[4,128], index: 4, kind: input, shape index: {}]
  %s5 = inlined_call_operand.vmem [shape: f32[4,128], index: 5, kind: input, shape index: {}]
  %s6 = inlined_call_operand.vmem [shape: bf16[4,128,128], index: 6, kind: input, shape index: {}]
  %s7 = inlined_call_operand.vmem [shape: f32[4,128], index: 7, kind: input, shape index: {}]
  %s8 = inlined_call_operand.vmem [shape: f32[4,128], index: 8, kind: input, shape index: {}]
  %s9 = inlined_call_operand.vmem [shape: bf16[128,384], index: 9, kind: input, shape index: {}]
  %s10 = inlined_call_operand.vmem [shape: bf16[2,128,128], index: 10, kind: input, shape index: {}]
  %s11 = inlined_call_operand.vmem [shape: f32[2,128], index: 11, kind: input, shape index: {}]
  %s12 = inlined_call_operand.vmem [shape: bf16[2,8,128], index: 12, kind: output, shape index: {}]
  %s13 = sld [smem:[#allocation0]]
  $region58: #{encoder_block_forward.1} parent=0
    _
  %s15 = ssub.s32 1, %s13
  %s16 = scalar_select 0, %s15, %s13
  // Predicated region
  $region2: #{encoder_block_forward.1} parent=0 // pred_check
    _
  $region3: #{encoder_block_forward.1} parent=0 // pred_check_branch
    %18 = sbr.rel (0) target = $region5
  $region4: #{encoder_block_forward.1} parent=0 // pred_region
    _
  $region5: #{encoder_block_forward.1} parent=0 // pred_fallthru
    _
  // Predicated region
  $region6: #{encoder_block_forward.1} parent=0 // pred_check
    _
  $region7: #{encoder_block_forward.1} parent=0 // pred_check_branch
    %20 = sbr.rel (0) target = $region9
  $region8: #{encoder_block_forward.1} parent=0 // pred_region
    _
  $region9: #{encoder_block_forward.1} parent=0 // pred_fallthru
    _
  // Predicated region
  $region10: #{encoder_block_forward.1} parent=0 // pred_check
    _
  $region11: #{encoder_block_forward.1} parent=0 // pred_check_branch
    %22 = sbr.rel (0) target = $region13
  $region12: #{encoder_block_forward.1} parent=0 // pred_region
    _
  $region13: #{encoder_block_forward.1} parent=0 // pred_fallthru
    _
  // Predicated region
  $region14: #{encoder_block_forward.1} parent=0 // pred_check
    _
  $region15: #{encoder_block_forward.1} parent=0 // pred_check_branch
    %24 = sbr.rel (0) target = $region17
  $region16: #{encoder_block_forward.1} parent=0 // pred_region
    _
  $region17: #{encoder_block_forward.1} parent=0 // pred_fallthru
    _
  // Predicated region
  $region18: #{encoder_block_forward.1} parent=0 // pred_check
    _
  $region19: #{encoder_block_forward.1} parent=0 // pred_check_branch
    %26 = sbr.rel (0) target = $region21
  $region20: #{encoder_block_forward.1} parent=0 // pred_region
    _
  $region21: #{encoder_block_forward.1} parent=0 // pred_fallthru
    _
  // Predicated region
  $region22: #{encoder_block_forward.1} parent=0 // pred_check
    _
  $region23: #{encoder_block_forward.1} parent=0 // pred_check_branch
    %28 = sbr.rel (0) target = $region25
  $region24: #{encoder_block_forward.1} parent=0 // pred_region
    _
  $region25: #{encoder_block_forward.1} parent=0 // pred_fallthru
    _
  // Predicated region
  $region26: #{encoder_block_forward.1} parent=0 // pred_check
    _
  $region27: #{encoder_block_forward.1} parent=0 // pred_check_branch
    %30 = sbr.rel (0) target = $region29
  $region28: #{encoder_block_forward.1} parent=0 // pred_region
    _
  $region29: #{encoder_block_forward.1} parent=0 // pred_fallthru
    _
  // Predicated region
  $region30: #{encoder_block_forward.1} parent=0 // pred_check
    _
  $region31: #{encoder_block_forward.1} parent=0 // pred_check_branch
    %32 = sbr.rel (0) target = $region33
  $region32: #{encoder_block_forward.1} parent=0 // pred_region
    _
  $region33: #{encoder_block_forward.1} parent=0 // pred_fallthru
    _
  // Predicated region
  $region34: #{encoder_block_forward.1} parent=0 // pred_check
    _
  $region35: #{encoder_block_forward.1} parent=0 // pred_check_branch
    %34 = sbr.rel (0) target = $region37
  $region36: #{encoder_block_forward.1} parent=0 // pred_region
    _
  $region37: #{encoder_block_forward.1} parent=0 // pred_fallthru
    _
  // Predicated region
  $region38: #{encoder_block_forward.1} parent=0 // pred_check
    _
  $region39: #{encoder_block_forward.1} parent=0 // pred_check_branch
    %36 = sbr.rel (0) target = $region41
  $region40: #{encoder_block_forward.1} parent=0 // pred_region
    _
  $region41: #{encoder_block_forward.1} parent=0 // pred_fallthru
    _
  // Predicated region
  $region42: #{encoder_block_forward.1} parent=0 // pred_check
    _
  $region43: #{encoder_block_forward.1} parent=0 // pred_check_branch
    %38 = sbr.rel (0) target = $region45
  $region44: #{encoder_block_forward.1} parent=0 // pred_region
    _
  $region45: #{encoder_block_forward.1} parent=0 // pred_fallthru
    _
  // Predicated region
  $region46: #{encoder_block_forward.1} parent=0 // pred_check
    _
  $region47: #{encoder_block_forward.1} parent=0 // pred_check_branch
    %40 = sbr.rel (0) target = $region49
  $region48: #{encoder_block_forward.1} parent=0 // pred_region
    _
  $region49: #{encoder_block_forward.1} parent=0 // pred_fallthru
    _
  %v42 = vld [vmem:[%s0] sm:$0xff]
  %v43 = vld [vmem:[%s0 + $0x8] sm:$0xff]
  %v44 = vld [vmem:[%s1] sm:$0xff]
  %v45 = vadd.f32 %v42, %v44
  %v46 = vadd.f32 %v43, %v44
  %v47 = vld [vmem:[%s2] sm:$0x1]
  %v48 = vld [vmem:[%s2 + $0x1] sm:$0x1]
  %v49 = vsub.f32 1.0, %v47
  %v50 = vsub.f32 1.0, %v48
  %v51 = vmul.f32 %v49, -1e+30
  %v52 = vmul.f32 %v50, -1e+30
  %v53 = vld [vmem:[%s3] sm:$0x1]
  %v54 = vld [vmem:[%s4] sm:$0x1]
  %55 = vadd.xlane.f32.xlu0 %v45
  %v56 = vpop.xlane.xlu0 %55
  %57 = vadd.xlane.f32.xlu0 %v46
  %v58 = vpop.xlane.xlu0 %57
  %v59 = vmul.f32 %v56, 0.010416667
  %v60 = vmul.f32 %v58, 0.010416667
  %v61 = vmul.f32 %v45, %v45
  %v62 = vmul.f32 %v46, %v46
  %63 = vadd.xlane.f32.xlu0 %v61
  %v64 = vpop.xlane.xlu0 %63
  %65 = vadd.xlane.f32.xlu0 %v62
  %v66 = vpop.xlane.xlu0 %65
  %v67 = vmul.f32 %v64, 0.010416667
  %v68 = vmul.f32 %v66, 0.010416667
  %v69 = vmul.f32 %v59, %v59
  %v70 = vmul.f32 %v60, %v60
  %v71 = vsub.f32 %v67, %v69
  %v72 = vsub.f32 %v68, %v70
  %v73 = vmax.f32 %v71, 0.0
  %v74 = vmax.f32 %v72, 0.0
  %v75 = vsub.f32 %v45, %v59
  %v76 = vsub.f32 %v46, %v60
  %v77 = vadd.f32 %v73, 1e-05
  %v78 = vadd.f32 %v74, 1e-05
  %v79 = vrsqrt.pop %v77
  %v80 = vrsqrt.pop %v78
  %v81 = vmul.f32 %v75, %v79
  %v82 = vmul.f32 %v76, %v80
  %v83 = vlaneseq
  %v84 = vshrl.u32 %v83, 7
  %v85 = vsub.s32 0, %v84
  %v86 = vrot.slane %v53, %v85
  %v87 = vmul.f32 %v81, %v86
  %v88 = vmul.f32 %v82, %v86
  %v89 = vlaneseq
  %v90 = vshrl.u32 %v89, 7
  %v91 = vsub.s32 0, %v90
  %v92 = vrot.slane %v54, %v91
  %v93 = vadd.f32 %v87, %v92
  %v94 = vadd.f32 %v88, %v92
  %v95 = vld [vmem:[%s5] sm:$0x1]
  %v96 = vlaneseq
  %v97 = vshrl.u32 %v96, 7
  %v98 = vsub.s32 0, %v97
  %v99 = vrot.slane %v95, %v98
  %v100 = vmul.f32 %v93, %v99
  %v101 = vmul.f32 %v94, %v99
  %v102 = vpack.c.bf16 %v101, %v100
  %v103 = vld [vmem:[%s6] sm:$0xf]
  %v104 = vld [vmem:[%s6 + $0x4] sm:$0xf]
  %v105 = vld [vmem:[%s6 + $0x8] sm:$0xf]
  %v106 = vld [vmem:[%s6 + $0xc] sm:$0xf]
  %v107 = vld [vmem:[%s6 + $0x10] sm:$0xf]
  %v108 = vld [vmem:[%s6 + $0x14] sm:$0xf]
  %v109 = vld [vmem:[%s6 + $0x18] sm:$0xf]
  %v110 = vld [vmem:[%s6 + $0x1c] sm:$0xf]
  %v111 = vld [vmem:[%s6 + $0x20] sm:$0xf]
  %v112 = vld [vmem:[%s6 + $0x24] sm:$0xf]
  %v113 = vld [vmem:[%s6 + $0x28] sm:$0xf]
  %v114 = vld [vmem:[%s6 + $0x2c] sm:$0xf]
  %v115 = vld [vmem:[%s6 + $0x30] sm:$0xf]
  %v116 = vld [vmem:[%s6 + $0x34] sm:$0xf]
  %v117 = vld [vmem:[%s6 + $0x38] sm:$0xf]
  %v118 = vld [vmem:[%s6 + $0x3c] sm:$0xf]
  %v119 = vld [vmem:[%s7] sm:$0x1]
  %v120 = vlaneseq
  %v121 = vshrl.u32 %v120, 7
  %v122 = vsub.s32 0, %v121
  %v123 = vrot.slane %v119, %v122
  %v140 = vunpack.c.l.b16 %v103
  %v141 = vunpack.c.l.b16 %v104
  %v142 = vunpack.c.l.b16 %v105
  %v143 = vunpack.c.l.b16 %v106
  %v144 = vunpack.c.l.b16 %v107
  %v145 = vunpack.c.l.b16 %v108
  %v146 = vunpack.c.l.b16 %v109
  %v147 = vunpack.c.l.b16 %v110
  %v148 = vunpack.c.l.b16 %v111
  %v149 = vunpack.c.l.b16 %v112
  %v150 = vunpack.c.l.b16 %v113
  %v151 = vunpack.c.l.b16 %v114
  %v152 = vunpack.c.l.b16 %v115
  %v153 = vunpack.c.l.b16 %v116
  %v154 = vunpack.c.l.b16 %v117
  %v155 = vunpack.c.l.b16 %v118
  %v156 = vpack.c.b16 %v141, %v140
  %v157 = vpack.c.b16 %v143, %v142
  %v158 = vpack.c.b16 %v145, %v144
  %v159 = vpack.c.b16 %v147, %v146
  %v160 = vpack.c.b16 %v149, %v148
  %v161 = vpack.c.b16 %v151, %v150
  %v162 = vpack.c.b16 %v153, %v152
  %v163 = vpack.c.b16 %v155, %v154
  %172 = vmatprep.subr.bf16.mxu0 0
  %173 = vmatpush1.bf16.msra.mxu0 %v163
  %174 = vmatprep.subr.bf16.mxu0 0
  %175 = vmatpush1.bf16.msra.mxu0 %v162
  %176 = vmatprep.subr.bf16.mxu0 0
  %177 = vmatpush1.bf16.msra.mxu0 %v161
  %178 = vmatprep.subr.bf16.mxu0 0
  %179 = vmatpush1.bf16.msra.mxu0 %v160
  %180 = vmatprep.subr.bf16.mxu0 0
  %181 = vmatpush1.bf16.msra.mxu0 %v159
  %182 = vmatprep.subr.bf16.mxu0 0
  %183 = vmatpush1.bf16.msra.mxu0 %v158
  %184 = vmatprep.subr.bf16.mxu0 0
  %185 = vmatpush1.bf16.msra.mxu0 %v157
  %186 = vmatprep.subr.bf16.mxu0 0
  %187 = vmatpush1.bf16.msra.mxu0 %v156
  %188 = vmatprep.subr.bf16.mxu0 0
  %189 = vmatpush2.bf16.msra.mxu0 0
  %190 = vmatprep.subr.bf16.mxu0 0
  %191 = vmatpush2.bf16.msra.mxu0 0
  %192 = vmatprep.subr.bf16.mxu0 0
  %193 = vmatpush2.bf16.msra.mxu0 0
  %194 = vmatprep.subr.bf16.mxu0 0
  %195 = vmatpush2.bf16.msra.mxu0 0
  %196 = vmatprep.subr.bf16.mxu0 0
  %197 = vmatpush2.bf16.msra.mxu0 0
  %198 = vmatprep.subr.bf16.mxu0 0
  %199 = vmatpush2.bf16.msra.mxu0 0
  %200 = vmatprep.subr.bf16.mxu0 0
  %201 = vmatpush2.bf16.msra.mxu0 0
  %202 = vmatprep.subr.bf16.mxu0 0
  %203 = vmatpush2.bf16.msra.mxu0 0
  %204 = vmatprep.mubr.bf16.mxu0 0
  %205 = vmatmul.mubr.bf16.gmra.mxu0 %v102
  %v206 = vpop.f32.mrf.mxu0
  %v207 = vadd.f32 %v123, %v206
  %v208 = vpop.f32.mrf.mxu0
  %v209 = vpop.f32.mrf.mxu0
  %v210 = vadd.f32 %v123, %v209
  %v211 = vpop.f32.mrf.mxu0
  %212 = vdwg.mxu0
  %v213 = vmax.f32 %v207, 0.0
  %v214 = vmax.f32 %v210, 0.0
  %v215 = vld [vmem:[%s3 + $0x1] sm:$0x1]
  %v216 = vld [vmem:[%s4 + $0x1] sm:$0x1]
  %217 = vadd.xlane.f32.xlu0 %v213
  %v218 = vpop.xlane.xlu0 %217
  %219 = vadd.xlane.f32.xlu0 %v214
  %v220 = vpop.xlane.xlu0 %219
  %v221 = vmul.f32 %v218, 0.010416667
  %v222 = vmul.f32 %v220, 0.010416667
  %v223 = vmul.f32 %v213, %v213
  %v224 = vmul.f32 %v214, %v214
  %225 = vadd.xlane.f32.xlu0 %v223
  %v226 = vpop.xlane.xlu0 %225
  %227 = vadd.xlane.f32.xlu0 %v224
  %v228 = vpop.xlane.xlu0 %227
  %v229 = vmul.f32 %v226, 0.010416667
  %v230 = vmul.f32 %v228, 0.010416667
  %v231 = vmul.f32 %v221, %v221
  %v232 = vmul.f32 %v222, %v222
  %v233 = vsub.f32 %v229, %v231
  %v234 = vsub.f32 %v230, %v232
  %v235 = vmax.f32 %v233, 0.0
  %v236 = vmax.f32 %v234, 0.0
  %v237 = vsub.f32 %v213, %v221
  %v238 = vsub.f32 %v214, %v222
  %v239 = vadd.f32 %v235, 1e-05
  %v240 = vadd.f32 %v236, 1e-05
  %v241 = vrsqrt.pop %v239
  %v242 = vrsqrt.pop %v240
  %v243 = vmul.f32 %v237, %v241
  %v244 = vmul.f32 %v238, %v242
  %v245 = vlaneseq
  %v246 = vshrl.u32 %v245, 7
  %v247 = vsub.s32 0, %v246
  %v248 = vrot.slane %v215, %v247
  %v249 = vmul.f32 %v243, %v248
  %v250 = vmul.f32 %v244, %v248
  %v251 = vlaneseq
  %v252 = vshrl.u32 %v251, 7
  %v253 = vsub.s32 0, %v252
  %v254 = vrot.slane %v216, %v253
  %v255 = vadd.f32 %v249, %v254
  %v256 = vadd.f32 %v250, %v254
  %v257 = vld [vmem:[%s5 + $0x1] sm:$0x1]
  %v258 = vlaneseq
  %v259 = vshrl.u32 %v258, 7
  %v260 = vsub.s32 0, %v259
  %v261 = vrot.slane %v257, %v260
  %v262 = vmul.f32 %v255, %v261
  %v263 = vmul.f32 %v256, %v261
  %v264 = vpack.c.bf16 %v263, %v262
  %s265 = scalar_lea.vmem %s6, 64
  %v266 = vld [vmem:[%s265] sm:$0xf]
  %v267 = vld [vmem:[%s265 + $0x4] sm:$0xf]
  %v268 = vld [vmem:[%s265 + $0x8] sm:$0xf]
  %v269 = vld [vmem:[%s265 + $0xc] sm:$0xf]
  %v270 = vld [vmem:[%s265 + $0x10] sm:$0xf]
  %v271 = vld [vmem:[%s265 + $0x14] sm:$0xf]
  %v272 = vld [vmem:[%s265 + $0x18] sm:$0xf]
  %v273 = vld [vmem:[%s265 + $0x1c] sm:$0xf]
  %v274 = vld [vmem:[%s265 + $0x20] sm:$0xf]
  %v275 = vld [vmem:[%s265 + $0x24] sm:$0xf]
  %v276 = vld [vmem:[%s265 + $0x28] sm:$0xf]
  %v277 = vld [vmem:[%s265 + $0x2c] sm:$0xf]
  %v278 = vld [vmem:[%s265 + $0x30] sm:$0xf]
  %v279 = vld [vmem:[%s265 + $0x34] sm:$0xf]
  %v280 = vld [vmem:[%s265 + $0x38] sm:$0xf]
  %v281 = vld [vmem:[%s265 + $0x3c] sm:$0xf]
  %v282 = vld [vmem:[%s7 + $0x1] sm:$0x1]
  %v283 = vlaneseq
  %v284 = vshrl.u32 %v283, 7
  %v285 = vsub.s32 0, %v284
  %v286 = vrot.slane %v282, %v285
  %v303 = vunpack.c.l.b16 %v266
  %v304 = vunpack.c.l.b16 %v267
  %v305 = vunpack.c.l.b16 %v268
  %v306 = vunpack.c.l.b16 %v269
  %v307 = vunpack.c.l.b16 %v270
  %v308 = vunpack.c.l.b16 %v271
  %v309 = vunpack.c.l.b16 %v272
  %v310 = vunpack.c.l.b16 %v273
  %v311 = vunpack.c.l.b16 %v274
  %v312 = vunpack.c.l.b16 %v275
  %v313 = vunpack.c.l.b16 %v276
  %v314 = vunpack.c.l.b16 %v277
  %v315 = vunpack.c.l.b16 %v278
  %v316 = vunpack.c.l.b16 %v279
  %v317 = vunpack.c.l.b16 %v280
  %v318 = vunpack.c.l.b16 %v281
  %v319 = vpack.c.b16 %v304, %v303
  %v320 = vpack.c.b16 %v306, %v305
  %v321 = vpack.c.b16 %v308, %v307
  %v322 = vpack.c.b16 %v310, %v309
  %v323 = vpack.c.b16 %v312, %v311
  %v324 = vpack.c.b16 %v314, %v313
  %v325 = vpack.c.b16 %v316, %v315
  %v326 = vpack.c.b16 %v318, %v317
  %335 = vmatprep.subr.bf16.mxu0 0
  %336 = vmatpush1.bf16.msra.mxu0 %v326
  %337 = vmatprep.subr.bf16.mxu0 0
  %338 = vmatpush1.bf16.msra.mxu0 %v325
  %339 = vmatprep.subr.bf16.mxu0 0
  %340 = vmatpush1.bf16.msra.mxu0 %v324
  %341 = vmatprep.subr.bf16.mxu0 0
  %342 = vmatpush1.bf16.msra.mxu0 %v323
  %343 = vmatprep.subr.bf16.mxu0 0
  %344 = vmatpush1.bf16.msra.mxu0 %v322
  %345 = vmatprep.subr.bf16.mxu0 0
  %346 = vmatpush1.bf16.msra.mxu0 %v321
  %347 = vmatprep.subr.bf16.mxu0 0
  %348 = vmatpush1.bf16.msra.mxu0 %v320
  %349 = vmatprep.subr.bf16.mxu0 0
  %350 = vmatpush1.bf16.msra.mxu0 %v319
  %351 = vmatprep.subr.bf16.mxu0 0
  %352 = vmatpush2.bf16.msra.mxu0 0
  %353 = vmatprep.subr.bf16.mxu0 0
  %354 = vmatpush2.bf16.msra.mxu0 0
  %355 = vmatprep.subr.bf16.mxu0 0
  %356 = vmatpush2.bf16.msra.mxu0 0
  %357 = vmatprep.subr.bf16.mxu0 0
  %358 = vmatpush2.bf16.msra.mxu0 0
  %359 = vmatprep.subr.bf16.mxu0 0
  %360 = vmatpush2.bf16.msra.mxu0 0
  %361 = vmatprep.subr.bf16.mxu0 0
  %362 = vmatpush2.bf16.msra.mxu0 0
  %363 = vmatprep.subr.bf16.mxu0 0
  %364 = vmatpush2.bf16.msra.mxu0 0
  %365 = vmatprep.subr.bf16.mxu0 0
  %366 = vmatpush2.bf16.msra.mxu0 0
  %367 = vmatprep.mubr.bf16.mxu0 0
  %368 = vmatmul.mubr.bf16.gmra.mxu0 %v264
  %v369 = vpop.f32.mrf.mxu0
  %v370 = vadd.f32 %v286, %v369
  %v371 = vpop.f32.mrf.mxu0
  %v372 = vpop.f32.mrf.mxu0
  %v373 = vadd.f32 %v286, %v372
  %v374 = vpop.f32.mrf.mxu0
  %375 = vdwg.mxu0
  %v376 = vmax.f32 %v370, 0.0
  %v377 = vmax.f32 %v373, 0.0
  %v378 = vld [vmem:[%s3 + $0x2] sm:$0x1]
  %v379 = vld [vmem:[%s4 + $0x2] sm:$0x1]
  %380 = vadd.xlane.f32.xlu0 %v376
  %v381 = vpop.xlane.xlu0 %380
  %382 = vadd.xlane.f32.xlu0 %v377
  %v383 = vpop.xlane.xlu0 %382
  %v384 = vmul.f32 %v381, 0.010416667
  %v385 = vmul.f32 %v383, 0.010416667
  %v386 = vmul.f32 %v376, %v376
  %v387 = vmul.f32 %v377, %v377
  %388 = vadd.xlane.f32.xlu0 %v386
  %v389 = vpop.xlane.xlu0 %388
  %390 = vadd.xlane.f32.xlu0 %v387
  %v391 = vpop.xlane.xlu0 %390
  %v392 = vmul.f32 %v389, 0.010416667
  %v393 = vmul.f32 %v391, 0.010416667
  %v394 = vmul.f32 %v384, %v384
  %v395 = vmul.f32 %v385, %v385
  %v396 = vsub.f32 %v392, %v394
  %v397 = vsub.f32 %v393, %v395
  %v398 = vmax.f32 %v396, 0.0
  %v399 = vmax.f32 %v397, 0.0
  %v400 = vsub.f32 %v376, %v384
  %v401 = vsub.f32 %v377, %v385
  %v402 = vadd.f32 %v398, 1e-05
  %v403 = vadd.f32 %v399, 1e-05
  %v404 = vrsqrt.pop %v402
  %v405 = vrsqrt.pop %v403
  %v406 = vmul.f32 %v400, %v404
  %v407 = vmul.f32 %v401, %v405
  %v408 = vlaneseq
  %v409 = vshrl.u32 %v408, 7
  %v410 = vsub.s32 0, %v409
  %v411 = vrot.slane %v378, %v410
  %v412 = vmul.f32 %v406, %v411
  %v413 = vmul.f32 %v407, %v411
  %v414 = vlaneseq
  %v415 = vshrl.u32 %v414, 7
  %v416 = vsub.s32 0, %v415
  %v417 = vrot.slane %v379, %v416
  %v418 = vadd.f32 %v412, %v417
  %v419 = vadd.f32 %v413, %v417
  %v420 = vld [vmem:[%s5 + $0x2] sm:$0x1]
  %v421 = vlaneseq
  %v422 = vshrl.u32 %v421, 7
  %v423 = vsub.s32 0, %v422
  %v424 = vrot.slane %v420, %v423
  %v425 = vmul.f32 %v418, %v424
  %v426 = vmul.f32 %v419, %v424
  %v427 = vpack.c.bf16 %v426, %v425
  %s428 = scalar_lea.vmem %s6, 128
  %v429 = vld [vmem:[%s428] sm:$0xf]
  %v430 = vld [vmem:[%s428 + $0x4] sm:$0xf]
  %v431 = vld [vmem:[%s428 + $0x8] sm:$0xf]
  %v432 = vld [vmem:[%s428 + $0xc] sm:$0xf]
  %v433 = vld [vmem:[%s428 + $0x10] sm:$0xf]
  %v434 = vld [vmem:[%s428 + $0x14] sm:$0xf]
  %v435 = vld [vmem:[%s428 + $0x18] sm:$0xf]
  %v436 = vld [vmem:[%s428 + $0x1c] sm:$0xf]
  %v437 = vld [vmem:[%s428 + $0x20] sm:$0xf]
  %v438 = vld [vmem:[%s428 + $0x24] sm:$0xf]
  %v439 = vld [vmem:[%s428 + $0x28] sm:$0xf]
  %v440 = vld [vmem:[%s428 + $0x2c] sm:$0xf]
  %v441 = vld [vmem:[%s428 + $0x30] sm:$0xf]
  %v442 = vld [vmem:[%s428 + $0x34] sm:$0xf]
  %v443 = vld [vmem:[%s428 + $0x38] sm:$0xf]
  %v444 = vld [vmem:[%s428 + $0x3c] sm:$0xf]
  %v445 = vld [vmem:[%s7 + $0x2] sm:$0x1]
  %v446 = vlaneseq
  %v447 = vshrl.u32 %v446, 7
  %v448 = vsub.s32 0, %v447
  %v449 = vrot.slane %v445, %v448
  %v466 = vunpack.c.l.b16 %v429
  %v467 = vunpack.c.l.b16 %v430
  %v468 = vunpack.c.l.b16 %v431
  %v469 = vunpack.c.l.b16 %v432
  %v470 = vunpack.c.l.b16 %v433
  %v471 = vunpack.c.l.b16 %v434
  %v472 = vunpack.c.l.b16 %v435
  %v473 = vunpack.c.l.b16 %v436
  %v474 = vunpack.c.l.b16 %v437
  %v475 = vunpack.c.l.b16 %v438
  %v476 = vunpack.c.l.b16 %v439
  %v477 = vunpack.c.l.b16 %v440
  %v478 = vunpack.c.l.b16 %v441
  %v479 = vunpack.c.l.b16 %v442
  %v480 = vunpack.c.l.b16 %v443
  %v481 = vunpack.c.l.b16 %v444
  %v482 = vpack.c.b16 %v467, %v466
  %v483 = vpack.c.b16 %v469, %v468
  %v484 = vpack.c.b16 %v471, %v470
  %v485 = vpack.c.b16 %v473, %v472
  %v486 = vpack.c.b16 %v475, %v474
  %v487 = vpack.c.b16 %v477, %v476
  %v488 = vpack.c.b16 %v479, %v478
  %v489 = vpack.c.b16 %v481, %v480
  %498 = vmatprep.subr.bf16.mxu0 0
  %499 = vmatpush1.bf16.msra.mxu0 %v489
  %500 = vmatprep.subr.bf16.mxu0 0
  %501 = vmatpush1.bf16.msra.mxu0 %v488
  %502 = vmatprep.subr.bf16.mxu0 0
  %503 = vmatpush1.bf16.msra.mxu0 %v487
  %504 = vmatprep.subr.bf16.mxu0 0
  %505 = vmatpush1.bf16.msra.mxu0 %v486
  %506 = vmatprep.subr.bf16.mxu0 0
  %507 = vmatpush1.bf16.msra.mxu0 %v485
  %508 = vmatprep.subr.bf16.mxu0 0
  %509 = vmatpush1.bf16.msra.mxu0 %v484
  %510 = vmatprep.subr.bf16.mxu0 0
  %511 = vmatpush1.bf16.msra.mxu0 %v483
  %512 = vmatprep.subr.bf16.mxu0 0
  %513 = vmatpush1.bf16.msra.mxu0 %v482
  %514 = vmatprep.subr.bf16.mxu0 0
  %515 = vmatpush2.bf16.msra.mxu0 0
  %516 = vmatprep.subr.bf16.mxu0 0
  %517 = vmatpush2.bf16.msra.mxu0 0
  %518 = vmatprep.subr.bf16.mxu0 0
  %519 = vmatpush2.bf16.msra.mxu0 0
  %520 = vmatprep.subr.bf16.mxu0 0
  %521 = vmatpush2.bf16.msra.mxu0 0
  %522 = vmatprep.subr.bf16.mxu0 0
  %523 = vmatpush2.bf16.msra.mxu0 0
  %524 = vmatprep.subr.bf16.mxu0 0
  %525 = vmatpush2.bf16.msra.mxu0 0
  %526 = vmatprep.subr.bf16.mxu0 0
  %527 = vmatpush2.bf16.msra.mxu0 0
  %528 = vmatprep.subr.bf16.mxu0 0
  %529 = vmatpush2.bf16.msra.mxu0 0
  %530 = vmatprep.mubr.bf16.mxu0 0
  %531 = vmatmul.mubr.bf16.gmra.mxu0 %v427
  %v532 = vpop.f32.mrf.mxu0
  %v533 = vadd.f32 %v449, %v532
  %v534 = vpop.f32.mrf.mxu0
  %v535 = vpop.f32.mrf.mxu0
  %v536 = vadd.f32 %v449, %v535
  %v537 = vpop.f32.mrf.mxu0
  %538 = vdwg.mxu0
  %v539 = vmax.f32 %v533, 0.0
  %v540 = vmax.f32 %v536, 0.0
  %v541 = vld [vmem:[%s3 + $0x3] sm:$0x1]
  %v542 = vld [vmem:[%s4 + $0x3] sm:$0x1]
  %543 = vadd.xlane.f32.xlu0 %v539
  %v544 = vpop.xlane.xlu0 %543
  %545 = vadd.xlane.f32.xlu0 %v540
  %v546 = vpop.xlane.xlu0 %545
  %v547 = vmul.f32 %v544, 0.010416667
  %v548 = vmul.f32 %v546, 0.010416667
  %v549 = vmul.f32 %v539, %v539
  %v550 = vmul.f32 %v540, %v540
  %551 = vadd.xlane.f32.xlu0 %v549
  %v552 = vpop.xlane.xlu0 %551
  %553 = vadd.xlane.f32.xlu0 %v550
  %v554 = vpop.xlane.xlu0 %553
  %v555 = vmul.f32 %v552, 0.010416667
  %v556 = vmul.f32 %v554, 0.010416667
  %v557 = vmul.f32 %v547, %v547
  %v558 = vmul.f32 %v548, %v548
  %v559 = vsub.f32 %v555, %v557
  %v560 = vsub.f32 %v556, %v558
  %v561 = vmax.f32 %v559, 0.0
  %v562 = vmax.f32 %v560, 0.0
  %v563 = vsub.f32 %v539, %v547
  %v564 = vsub.f32 %v540, %v548
  %v565 = vadd.f32 %v561, 1e-05
  %v566 = vadd.f32 %v562, 1e-05
  %v567 = vrsqrt.pop %v565
  %v568 = vrsqrt.pop %v566
  %v569 = vmul.f32 %v563, %v567
  %v570 = vmul.f32 %v564, %v568
  %v571 = vlaneseq
  %v572 = vshrl.u32 %v571, 7
  %v573 = vsub.s32 0, %v572
  %v574 = vrot.slane %v541, %v573
  %v575 = vmul.f32 %v569, %v574
  %v576 = vmul.f32 %v570, %v574
  %v577 = vlaneseq
  %v578 = vshrl.u32 %v577, 7
  %v579 = vsub.s32 0, %v578
  %v580 = vrot.slane %v542, %v579
  %v581 = vadd.f32 %v575, %v580
  %v582 = vadd.f32 %v576, %v580
  %v583 = vld [vmem:[%s5 + $0x3] sm:$0x1]
  %v584 = vlaneseq
  %v585 = vshrl.u32 %v584, 7
  %v586 = vsub.s32 0, %v585
  %v587 = vrot.slane %v583, %v586
  %v588 = vmul.f32 %v581, %v587
  %v589 = vmul.f32 %v582, %v587
  %v590 = vpack.c.bf16 %v589, %v588
  %s591 = scalar_lea.vmem %s6, 192
  %v592 = vld [vmem:[%s591] sm:$0xf]
  %v593 = vld [vmem:[%s591 + $0x4] sm:$0xf]
  %v594 = vld [vmem:[%s591 + $0x8] sm:$0xf]
  %v595 = vld [vmem:[%s591 + $0xc] sm:$0xf]
  %v596 = vld [vmem:[%s591 + $0x10] sm:$0xf]
  %v597 = vld [vmem:[%s591 + $0x14] sm:$0xf]
  %v598 = vld [vmem:[%s591 + $0x18] sm:$0xf]
  %v599 = vld [vmem:[%s591 + $0x1c] sm:$0xf]
  %v600 = vld [vmem:[%s591 + $0x20] sm:$0xf]
  %v601 = vld [vmem:[%s591 + $0x24] sm:$0xf]
  %v602 = vld [vmem:[%s591 + $0x28] sm:$0xf]
  %v603 = vld [vmem:[%s591 + $0x2c] sm:$0xf]
  %v604 = vld [vmem:[%s591 + $0x30] sm:$0xf]
  %v605 = vld [vmem:[%s591 + $0x34] sm:$0xf]
  %v606 = vld [vmem:[%s591 + $0x38] sm:$0xf]
  %v607 = vld [vmem:[%s591 + $0x3c] sm:$0xf]
  %v608 = vld [vmem:[%s7 + $0x3] sm:$0x1]
  %v609 = vlaneseq
  %v610 = vshrl.u32 %v609, 7
  %v611 = vsub.s32 0, %v610
  %v612 = vrot.slane %v608, %v611
  %v629 = vunpack.c.l.b16 %v592
  %v630 = vunpack.c.l.b16 %v593
  %v631 = vunpack.c.l.b16 %v594
  %v632 = vunpack.c.l.b16 %v595
  %v633 = vunpack.c.l.b16 %v596
  %v634 = vunpack.c.l.b16 %v597
  %v635 = vunpack.c.l.b16 %v598
  %v636 = vunpack.c.l.b16 %v599
  %v637 = vunpack.c.l.b16 %v600
  %v638 = vunpack.c.l.b16 %v601
  %v639 = vunpack.c.l.b16 %v602
  %v640 = vunpack.c.l.b16 %v603
  %v641 = vunpack.c.l.b16 %v604
  %v642 = vunpack.c.l.b16 %v605
  %v643 = vunpack.c.l.b16 %v606
  %v644 = vunpack.c.l.b16 %v607
  %v645 = vpack.c.b16 %v630, %v629
  %v646 = vpack.c.b16 %v632, %v631
  %v647 = vpack.c.b16 %v634, %v633
  %v648 = vpack.c.b16 %v636, %v635
  %v649 = vpack.c.b16 %v638, %v637
  %v650 = vpack.c.b16 %v640, %v639
  %v651 = vpack.c.b16 %v642, %v641
  %v652 = vpack.c.b16 %v644, %v643
  %661 = vmatprep.subr.bf16.mxu0 0
  %662 = vmatpush1.bf16.msra.mxu0 %v652
  %663 = vmatprep.subr.bf16.mxu0 0
  %664 = vmatpush1.bf16.msra.mxu0 %v651
  %665 = vmatprep.subr.bf16.mxu0 0
  %666 = vmatpush1.bf16.msra.mxu0 %v650
  %667 = vmatprep.subr.bf16.mxu0 0
  %668 = vmatpush1.bf16.msra.mxu0 %v649
  %669 = vmatprep.subr.bf16.mxu0 0
  %670 = vmatpush1.bf16.msra.mxu0 %v648
  %671 = vmatprep.subr.bf16.mxu0 0
  %672 = vmatpush1.bf16.msra.mxu0 %v647
  %673 = vmatprep.subr.bf16.mxu0 0
  %674 = vmatpush1.bf16.msra.mxu0 %v646
  %675 = vmatprep.subr.bf16.mxu0 0
  %676 = vmatpush1.bf16.msra.mxu0 %v645
  %677 = vmatprep.subr.bf16.mxu0 0
  %678 = vmatpush2.bf16.msra.mxu0 0
  %679 = vmatprep.subr.bf16.mxu0 0
  %680 = vmatpush2.bf16.msra.mxu0 0
  %681 = vmatprep.subr.bf16.mxu0 0
  %682 = vmatpush2.bf16.msra.mxu0 0
  %683 = vmatprep.subr.bf16.mxu0 0
  %684 = vmatpush2.bf16.msra.mxu0 0
  %685 = vmatprep.subr.bf16.mxu0 0
  %686 = vmatpush2.bf16.msra.mxu0 0
  %687 = vmatprep.subr.bf16.mxu0 0
  %688 = vmatpush2.bf16.msra.mxu0 0
  %689 = vmatprep.subr.bf16.mxu0 0
  %690 = vmatpush2.bf16.msra.mxu0 0
  %691 = vmatprep.subr.bf16.mxu0 0
  %692 = vmatpush2.bf16.msra.mxu0 0
  %693 = vmatprep.mubr.bf16.mxu0 0
  %694 = vmatmul.mubr.bf16.gmra.mxu0 %v590
  %v695 = vpop.f32.mrf.mxu0
  %v696 = vadd.f32 %v612, %v695
  %v697 = vpop.f32.mrf.mxu0
  %v698 = vpop.f32.mrf.mxu0
  %v699 = vadd.f32 %v612, %v698
  %v700 = vpop.f32.mrf.mxu0
  %701 = vdwg.mxu0
  %v702 = vmax.f32 %v696, 0.0
  %v703 = vmax.f32 %v699, 0.0
  %v704 = vld [vmem:[%s8] sm:$0x1]
  %v705 = vld [vmem:[%s8 + $0x1] sm:$0x1]
  %706 = vadd.xlane.f32.xlu0 %v702
  %v707 = vpop.xlane.xlu0 %706
  %708 = vadd.xlane.f32.xlu0 %v703
  %v709 = vpop.xlane.xlu0 %708
  %v710 = vmul.f32 %v707, 0.010416667
  %v711 = vmul.f32 %v709, 0.010416667
  %v712 = vmul.f32 %v702, %v702
  %v713 = vmul.f32 %v703, %v703
  %714 = vadd.xlane.f32.xlu0 %v712
  %v715 = vpop.xlane.xlu0 %714
  %716 = vadd.xlane.f32.xlu0 %v713
  %v717 = vpop.xlane.xlu0 %716
  %v718 = vmul.f32 %v715, 0.010416667
  %v719 = vmul.f32 %v717, 0.010416667
  %v720 = vmul.f32 %v710, %v710
  %v721 = vmul.f32 %v711, %v711
  %v722 = vsub.f32 %v718, %v720
  %v723 = vsub.f32 %v719, %v721
  %v724 = vmax.f32 %v722, 0.0
  %v725 = vmax.f32 %v723, 0.0
  %v726 = vsub.f32 %v702, %v710
  %v727 = vsub.f32 %v703, %v711
  %v728 = vadd.f32 %v724, 1e-05
  %v729 = vadd.f32 %v725, 1e-05
  %v730 = vrsqrt.pop %v728
  %v731 = vrsqrt.pop %v729
  %v732 = vmul.f32 %v726, %v730
  %v733 = vmul.f32 %v727, %v731
  %v734 = vlaneseq
  %v735 = vshrl.u32 %v734, 7
  %v736 = vsub.s32 0, %v735
  %v737 = vrot.slane %v704, %v736
  %v738 = vmul.f32 %v732, %v737
  %v739 = vmul.f32 %v733, %v737
  %v740 = vlaneseq
  %v741 = vshrl.u32 %v740, 7
  %v742 = vsub.s32 0, %v741
  %v743 = vrot.slane %v705, %v742
  %v744 = vadd.f32 %v738, %v743
  %v745 = vadd.f32 %v739, %v743
  %v746 = vpack.c.bf16 %v745, %v744
  %v747 = vld [vmem:[%s9] sm:$0xff]
  %v748 = vld [vmem:[%s9 + $0x8] sm:$0xf]
  %v749 = vld [vmem:[%s9 + $0xc] sm:$0xff]
  %v750 = vld [vmem:[%s9 + $0x14] sm:$0xf]
  %v751 = vld [vmem:[%s9 + $0x18] sm:$0xff]
  %v752 = vld [vmem:[%s9 + $0x20] sm:$0xf]
  %v753 = vld [vmem:[%s9 + $0x24] sm:$0xff]
  %v754 = vld [vmem:[%s9 + $0x2c] sm:$0xf]
  %v755 = vld [vmem:[%s9 + $0x30] sm:$0xff]
  %v756 = vld [vmem:[%s9 + $0x38] sm:$0xf]
  %v757 = vld [vmem:[%s9 + $0x3c] sm:$0xff]
  %v758 = vld [vmem:[%s9 + $0x44] sm:$0xf]
  %v759 = vld [vmem:[%s9 + $0x48] sm:$0xff]
  %v760 = vld [vmem:[%s9 + $0x50] sm:$0xf]
  %v761 = vld [vmem:[%s9 + $0x54] sm:$0xff]
  %v762 = vld [vmem:[%s9 + $0x5c] sm:$0xf]
  %v763 = vld [vmem:[%s9 + $0x60] sm:$0xff]
  %v764 = vld [vmem:[%s9 + $0x68] sm:$0xf]
  %v765 = vld [vmem:[%s9 + $0x6c] sm:$0xff]
  %v766 = vld [vmem:[%s9 + $0x74] sm:$0xf]
  %v767 = vld [vmem:[%s9 + $0x78] sm:$0xff]
  %v768 = vld [vmem:[%s9 + $0x80] sm:$0xf]
  %v769 = vld [vmem:[%s9 + $0x84] sm:$0xff]
  %v770 = vld [vmem:[%s9 + $0x8c] sm:$0xf]
  %v771 = vld [vmem:[%s9 + $0x90] sm:$0xff]
  %v772 = vld [vmem:[%s9 + $0x98] sm:$0xf]
  %v773 = vld [vmem:[%s9 + $0x9c] sm:$0xff]
  %v774 = vld [vmem:[%s9 + $0xa4] sm:$0xf]
  %v775 = vld [vmem:[%s9 + $0xa8] sm:$0xff]
  %v776 = vld [vmem:[%s9 + $0xb0] sm:$0xf]
  %v777 = vld [vmem:[%s9 + $0xb4] sm:$0xff]
  %v778 = vld [vmem:[%s9 + $0xbc] sm:$0xf]
  %v811 = vunpack.c.l.b16 %v747
  %v812 = vunpack.c.h.b16 %v747
  %v813 = vunpack.c.l.b16 %v748
  %v814 = vunpack.c.l.b16 %v749
  %v815 = vunpack.c.h.b16 %v749
  %v816 = vunpack.c.l.b16 %v750
  %v817 = vunpack.c.l.b16 %v751
  %v818 = vunpack.c.h.b16 %v751
  %v819 = vunpack.c.l.b16 %v752
  %v820 = vunpack.c.l.b16 %v753
  %v821 = vunpack.c.h.b16 %v753
  %v822 = vunpack.c.l.b16 %v754
  %v823 = vunpack.c.l.b16 %v755
  %v824 = vunpack.c.h.b16 %v755
  %v825 = vunpack.c.l.b16 %v756
  %v826 = vunpack.c.l.b16 %v757
  %v827 = vunpack.c.h.b16 %v757
  %v828 = vunpack.c.l.b16 %v758
  %v829 = vunpack.c.l.b16 %v759
  %v830 = vunpack.c.h.b16 %v759
  %v831 = vunpack.c.l.b16 %v760
  %v832 = vunpack.c.l.b16 %v761
  %v833 = vunpack.c.h.b16 %v761
  %v834 = vunpack.c.l.b16 %v762
  %v835 = vunpack.c.l.b16 %v763
  %v836 = vunpack.c.h.b16 %v763
  %v837 = vunpack.c.l.b16 %v764
  %v838 = vunpack.c.l.b16 %v765
  %v839 = vunpack.c.h.b16 %v765
  %v840 = vunpack.c.l.b16 %v766
  %v841 = vunpack.c.l.b16 %v767
  %v842 = vunpack.c.h.b16 %v767
  %v843 = vunpack.c.l.b16 %v768
  %v844 = vunpack.c.l.b16 %v769
  %v845 = vunpack.c.h.b16 %v769
  %v846 = vunpack.c.l.b16 %v770
  %v847 = vunpack.c.l.b16 %v771
  %v848 = vunpack.c.h.b16 %v771
  %v849 = vunpack.c.l.b16 %v772
  %v850 = vunpack.c.l.b16 %v773
  %v851 = vunpack.c.h.b16 %v773
  %v852 = vunpack.c.l.b16 %v774
  %v853 = vunpack.c.l.b16 %v775
  %v854 = vunpack.c.h.b16 %v775
  %v855 = vunpack.c.l.b16 %v776
  %v856 = vunpack.c.l.b16 %v777
  %v857 = vunpack.c.h.b16 %v777
  %v858 = vunpack.c.l.b16 %v778
  %v859 = vpack.c.b16 %v814, %v811
  %v860 = vpack.c.b16 %v815, %v812
  %v861 = vpack.c.b16 %v816, %v813
  %v862 = vpack.c.b16 %v820, %v817
  %v863 = vpack.c.b16 %v821, %v818
  %v864 = vpack.c.b16 %v822, %v819
  %v865 = vpack.c.b16 %v826, %v823
  %v866 = vpack.c.b16 %v827, %v824
  %v867 = vpack.c.b16 %v828, %v825
  %v868 = vpack.c.b16 %v832, %v829
  %v869 = vpack.c.b16 %v833, %v830
  %v870 = vpack.c.b16 %v834, %v831
  %v871 = vpack.c.b16 %v838, %v835
  %v872 = vpack.c.b16 %v839, %v836
  %v873 = vpack.c.b16 %v840, %v837
  %v874 = vpack.c.b16 %v844, %v841
  %v875 = vpack.c.b16 %v845, %v842
  %v876 = vpack.c.b16 %v846, %v843
  %v877 = vpack.c.b16 %v850, %v847
  %v878 = vpack.c.b16 %v851, %v848
  %v879 = vpack.c.b16 %v852, %v849
  %v880 = vpack.c.b16 %v856, %v853
  %v881 = vpack.c.b16 %v857, %v854
  %v882 = vpack.c.b16 %v858, %v855
  %907 = vmatprep.subr.bf16.mxu0 %v881
  %908 = vmatpush1.bf16.msra.mxu0 %v880
  %909 = vmatprep.subr.bf16.mxu0 %v878
  %910 = vmatpush1.bf16.msra.mxu0 %v877
  %911 = vmatprep.subr.bf16.mxu0 %v875
  %912 = vmatpush1.bf16.msra.mxu0 %v874
  %913 = vmatprep.subr.bf16.mxu0 %v872
  %914 = vmatpush1.bf16.msra.mxu0 %v871
  %915 = vmatprep.subr.bf16.mxu0 %v869
  %916 = vmatpush1.bf16.msra.mxu0 %v868
  %917 = vmatprep.subr.bf16.mxu0 %v866
  %918 = vmatpush1.bf16.msra.mxu0 %v865
  %919 = vmatprep.subr.bf16.mxu0 %v863
  %920 = vmatpush1.bf16.msra.mxu0 %v862
  %921 = vmatprep.subr.bf16.mxu0 %v860
  %922 = vmatpush1.bf16.msra.mxu0 %v859
  %923 = vmatprep.subr.bf16.mxu0 0
  %924 = vmatpush2.bf16.msra.mxu0 0
  %925 = vmatprep.subr.bf16.mxu0 0
  %926 = vmatpush2.bf16.msra.mxu0 0
  %927 = vmatprep.subr.bf16.mxu0 0
  %928 = vmatpush2.bf16.msra.mxu0 0
  %929 = vmatprep.subr.bf16.mxu0 0
  %930 = vmatpush2.bf16.msra.mxu0 0
  %931 = vmatprep.subr.bf16.mxu0 0
  %932 = vmatpush2.bf16.msra.mxu0 0
  %933 = vmatprep.subr.bf16.mxu0 0
  %934 = vmatpush2.bf16.msra.mxu0 0
  %935 = vmatprep.subr.bf16.mxu0 0
  %936 = vmatpush2.bf16.msra.mxu0 0
  %937 = vmatprep.subr.bf16.mxu0 0
  %938 = vmatpush2.bf16.msra.mxu0 0
  %939 = vmatprep.mubr.bf16.mxu0 0
  %940 = vmatmul.mubr.bf16.gmra.mxu0 %v746
  %v941 = vpop.f32.mrf.mxu0
  %v942 = vadd.f32 0.0, %v941
  %v943 = vpop.f32.mrf.mxu0
  %v944 = vadd.f32 0.0, %v943
  %v945 = vpop.f32.mrf.mxu0
  %v946 = vadd.f32 0.0, %v945
  %v947 = vpop.f32.mrf.mxu0
  %v948 = vadd.f32 0.0, %v947
  %949 = vdwg.mxu0
  %950 = vmatprep.subr.bf16.mxu0 0
  %951 = vmatpush1.bf16.msra.mxu0 %v882
  %952 = vmatprep.subr.bf16.mxu0 0
  %953 = vmatpush1.bf16.msra.mxu0 %v879
  %954 = vmatprep.subr.bf16.mxu0 0
  %955 = vmatpush1.bf16.msra.mxu0 %v876
  %956 = vmatprep.subr.bf16.mxu0 0
  %957 = vmatpush1.bf16.msra.mxu0 %v873
  %958 = vmatprep.subr.bf16.mxu0 0
  %959 = vmatpush1.bf16.msra.mxu0 %v870
  %960 = vmatprep.subr.bf16.mxu0 0
  %961 = vmatpush1.bf16.msra.mxu0 %v867
  %962 = vmatprep.subr.bf16.mxu0 0
  %963 = vmatpush1.bf16.msra.mxu0 %v864
  %964 = vmatprep.subr.bf16.mxu0 0
  %965 = vmatpush1.bf16.msra.mxu0 %v861
  %966 = vmatprep.subr.bf16.mxu0 0
  %967 = vmatpush2.bf16.msra.mxu0 0
  %968 = vmatprep.subr.bf16.mxu0 0
  %969 = vmatpush2.bf16.msra.mxu0 0
  %970 = vmatprep.subr.bf16.mxu0 0
  %971 = vmatpush2.bf16.msra.mxu0 0
  %972 = vmatprep.subr.bf16.mxu0 0
  %973 = vmatpush2.bf16.msra.mxu0 0
  %974 = vmatprep.subr.bf16.mxu0 0
  %975 = vmatpush2.bf16.msra.mxu0 0
  %976 = vmatprep.subr.bf16.mxu0 0
  %977 = vmatpush2.bf16.msra.mxu0 0
  %978 = vmatprep.subr.bf16.mxu0 0
  %979 = vmatpush2.bf16.msra.mxu0 0
  %980 = vmatprep.subr.bf16.mxu0 0
  %981 = vmatpush2.bf16.msra.mxu0 0
  %982 = vmatprep.mubr.bf16.mxu0 0
  %983 = vmatmul.mubr.bf16.gmra.mxu0 %v746
  %v984 = vpop.f32.mrf.mxu0
  %v985 = vadd.f32 0.0, %v984
  %v986 = vpop.f32.mrf.mxu0
  %v987 = vpop.f32.mrf.mxu0
  %v988 = vadd.f32 0.0, %v987
  %v989 = vpop.f32.mrf.mxu0
  %990 = vdwg.mxu0
  %v991 = vpack.c.bf16 %v946, %v942
  %v992 = vpack.c.bf16 %v948, %v944
  %v993 = vpack.c.bf16 %v988, %v985
  %v995 = vunpack.c.l.b16 %v991
  %v996 = vunpack.c.h.b16 %v991
  %v997 = vpack.c.b16 %v995, %v995
  %v998 = vpack.c.b16 %v996, %v996
  %v1000 = vunpack.c.l.b16 %v992
  %v1001 = vunpack.c.h.b16 %v992
  %v1002 = vpack.c.b16 %v1000, %v1000
  %v1003 = vpack.c.b16 %v1001, %v1001
  %v1006 = vlaneseq
  %v1007 = vshrl.u32 %v1006, 7
  %v1008 = vsub.s32 0, %v1007
  %v1009 = vrot.slane %v51, %v1008
  %v1010 = vlaneseq
  %v1011 = vshrl.u32 %v1010, 7
  %v1012 = vsub.s32 0, %v1011
  %v1013 = vrot.slane %v52, %v1012
  %1016 = vrot.lane.b32.xlu0 %v997, 64
  %v1017 = vpop.permute.xlu0 %1016
  %vm1018 = vcmask 523264
  %v1020 = vsel %vm1018, %v997, 0
  %v1023 = vsel %vm1018, %v1017, 0
  %1025 = vmatprep.subr.bf16.mxu0 0
  %1026 = vmatpush1.bf16.xpose.msra.mxu0 0
  %1027 = vmatprep.subr.bf16.mxu0 0
  %1028 = vmatpush1.bf16.xpose.msra.mxu0 0
  %1029 = vmatprep.subr.bf16.mxu0 0
  %1030 = vmatpush1.bf16.xpose.msra.mxu0 0
  %1031 = vmatprep.subr.bf16.mxu0 0
  %1032 = vmatpush1.bf16.xpose.msra.mxu0 0
  %1033 = vmatprep.subr.bf16.mxu0 0
  %1034 = vmatpush1.bf16.xpose.msra.mxu0 0
  %1035 = vmatprep.subr.bf16.mxu0 0
  %1036 = vmatpush1.bf16.xpose.msra.mxu0 0
  %1037 = vmatprep.subr.bf16.mxu0 0
  %1038 = vmatpush1.bf16.xpose.msra.mxu0 0
  %1039 = vmatprep.subr.bf16.mxu0 0
  %1040 = vmatpush1.bf16.xpose.msra.mxu0 %v1023
  %1041 = vmatprep.subr.bf16.mxu0 0
  %1042 = vmatpush2.bf16.xpose.msra.mxu0 0
  %1043 = vmatprep.subr.bf16.mxu0 0
  %1044 = vmatpush2.bf16.xpose.msra.mxu0 0
  %1045 = vmatprep.subr.bf16.mxu0 0
  %1046 = vmatpush2.bf16.xpose.msra.mxu0 0
  %1047 = vmatprep.subr.bf16.mxu0 0
  %1048 = vmatpush2.bf16.xpose.msra.mxu0 0
  %1049 = vmatprep.subr.bf16.mxu0 0
  %1050 = vmatpush2.bf16.xpose.msra.mxu0 0
  %1051 = vmatprep.subr.bf16.mxu0 0
  %1052 = vmatpush2.bf16.xpose.msra.mxu0 0
  %1053 = vmatprep.subr.bf16.mxu0 0
  %1054 = vmatpush2.bf16.xpose.msra.mxu0 0
  %1055 = vmatprep.subr.bf16.mxu0 0
  %1056 = vmatpush2.bf16.xpose.msra.mxu0 0
  %1057 = vmatprep.mubr.bf16.mxu0 0
  %1058 = vmatmul.mubr.bf16.gmra.mxu0 %v1020
  %v1059 = vpop.f32.mrf.mxu0
  %v1060 = vadd.f32 %v1009, %v1059
  %v1061 = vpop.f32.mrf.mxu0
  %v1062 = vpop.f32.mrf.mxu0
  %v1063 = vpop.f32.mrf.mxu0
  %1064 = vdwg.mxu0
  %1065 = vrot.lane.b32.xlu0 %v998, 64
  %v1066 = vpop.permute.xlu0 %1065
  %v1068 = vsel %vm1018, %v998, 0
  %v1071 = vsel %vm1018, %v1066, 0
  %1073 = vmatprep.subr.bf16.mxu0 0
  %1074 = vmatpush1.bf16.xpose.msra.mxu0 0
  %1075 = vmatprep.subr.bf16.mxu0 0
  %1076 = vmatpush1.bf16.xpose.msra.mxu0 0
  %1077 = vmatprep.subr.bf16.mxu0 0
  %1078 = vmatpush1.bf16.xpose.msra.mxu0 0
  %1079 = vmatprep.subr.bf16.mxu0 0
  %1080 = vmatpush1.bf16.xpose.msra.mxu0 0
  %1081 = vmatprep.subr.bf16.mxu0 0
  %1082 = vmatpush1.bf16.xpose.msra.mxu0 0
  %1083 = vmatprep.subr.bf16.mxu0 0
  %1084 = vmatpush1.bf16.xpose.msra.mxu0 0
  %1085 = vmatprep.subr.bf16.mxu0 0
  %1086 = vmatpush1.bf16.xpose.msra.mxu0 0
  %1087 = vmatprep.subr.bf16.mxu0 0
  %1088 = vmatpush1.bf16.xpose.msra.mxu0 %v1071
  %1089 = vmatprep.subr.bf16.mxu0 0
  %1090 = vmatpush2.bf16.xpose.msra.mxu0 0
  %1091 = vmatprep.subr.bf16.mxu0 0
  %1092 = vmatpush2.bf16.xpose.msra.mxu0 0
  %1093 = vmatprep.subr.bf16.mxu0 0
  %1094 = vmatpush2.bf16.xpose.msra.mxu0 0
  %1095 = vmatprep.subr.bf16.mxu0 0
  %1096 = vmatpush2.bf16.xpose.msra.mxu0 0
  %1097 = vmatprep.subr.bf16.mxu0 0
  %1098 = vmatpush2.bf16.xpose.msra.mxu0 0
  %1099 = vmatprep.subr.bf16.mxu0 0
  %1100 = vmatpush2.bf16.xpose.msra.mxu0 0
  %1101 = vmatprep.subr.bf16.mxu0 0
  %1102 = vmatpush2.bf16.xpose.msra.mxu0 0
  %1103 = vmatprep.subr.bf16.mxu0 0
  %1104 = vmatpush2.bf16.xpose.msra.mxu0 0
  %1105 = vmatprep.mubr.bf16.mxu0 0
  %1106 = vmatmul.mubr.bf16.gmra.mxu0 %v1068
  %v1107 = vpop.f32.mrf.mxu0
  %v1108 = vadd.f32 %v1013, %v1107
  %v1109 = vpop.f32.mrf.mxu0
  %v1110 = vpop.f32.mrf.mxu0
  %v1111 = vpop.f32.mrf.mxu0
  %1112 = vdwg.mxu0
  %vm1113 = vcmask 64512
  %v1114 = vsel %vm1113, %v1060, -inf
  %1115 = vmax.xlane.f32.xlu0 %v1114
  %v1116 = vpop.xlane.xlu0 %1115
  %v1117 = vsel %vm1113, %v1108, -inf
  %1118 = vmax.xlane.f32.xlu0 %v1117
  %v1119 = vpop.xlane.xlu0 %1118
  %v1120 = vsub.f32 %v1060, %v1116
  %v1121 = vsub.f32 %v1108, %v1119
  %v1122 = vmul.f32 %v1120, 1.442695
  %v1123 = vpow.pop %v1122
  %v1124 = vmul.f32 %v1121, 1.442695
  %v1125 = vpow.pop %v1124
  %v1126 = vsel %vm1113, %v1123, 0.0
  %1127 = vadd.xlane.f32.xlu0 %v1126
  %v1128 = vpop.xlane.xlu0 %1127
  %v1129 = vsel %vm1113, %v1125, 0.0
  %1130 = vadd.xlane.f32.xlu0 %v1129
  %v1131 = vpop.xlane.xlu0 %1130
  %v1132 = vrcp.pop %v1128
  %v1133 = vrcp.pop %v1131
  %v1134 = vmul.f32 %v1123, %v1132
  %v1135 = vmul.f32 %v1125, %v1133
  %v1136 = vpack.c.bf16 %v1134, %v1134
  %v1137 = vpack.c.bf16 %v1135, %v1135
  %v1139 = vsel %vm1113, %v1136, 0
  %vm1141 = vcmask 1043456
  %v1143 = vsel %vm1141, %v1002, 0
  %1145 = vmatprep.subr.bf16.mxu0 0
  %1146 = vmatpush1.bf16.msra.mxu0 0
  %1147 = vmatprep.subr.bf16.mxu0 0
  %1148 = vmatpush1.bf16.msra.mxu0 0
  %1149 = vmatprep.subr.bf16.mxu0 0
  %1150 = vmatpush1.bf16.msra.mxu0 0
  %1151 = vmatprep.subr.bf16.mxu0 0
  %1152 = vmatpush1.bf16.msra.mxu0 0
  %1153 = vmatprep.subr.bf16.mxu0 0
  %1154 = vmatpush1.bf16.msra.mxu0 0
  %1155 = vmatprep.subr.bf16.mxu0 0
  %1156 = vmatpush1.bf16.msra.mxu0 0
  %1157 = vmatprep.subr.bf16.mxu0 0
  %1158 = vmatpush1.bf16.msra.mxu0 0
  %1159 = vmatprep.subr.bf16.mxu0 0
  %1160 = vmatpush1.bf16.msra.mxu0 %v1143
  %1161 = vmatprep.subr.bf16.mxu0 0
  %1162 = vmatpush2.bf16.msra.mxu0 0
  %1163 = vmatprep.subr.bf16.mxu0 0
  %1164 = vmatpush2.bf16.msra.mxu0 0
  %1165 = vmatprep.subr.bf16.mxu0 0
  %1166 = vmatpush2.bf16.msra.mxu0 0
  %1167 = vmatprep.subr.bf16.mxu0 0
  %1168 = vmatpush2.bf16.msra.mxu0 0
  %1169 = vmatprep.subr.bf16.mxu0 0
  %1170 = vmatpush2.bf16.msra.mxu0 0
  %1171 = vmatprep.subr.bf16.mxu0 0
  %1172 = vmatpush2.bf16.msra.mxu0 0
  %1173 = vmatprep.subr.bf16.mxu0 0
  %1174 = vmatpush2.bf16.msra.mxu0 0
  %1175 = vmatprep.subr.bf16.mxu0 0
  %1176 = vmatpush2.bf16.msra.mxu0 0
  %1177 = vmatprep.mubr.bf16.mxu0 0
  %1178 = vmatmul.mubr.bf16.gmra.mxu0 %v1139
  %v1179 = vpop.f32.mrf.mxu0
  %v1180 = vadd.f32 0.0, %v1179
  %v1181 = vpop.f32.mrf.mxu0
  %v1182 = vpop.f32.mrf.mxu0
  %v1183 = vpop.f32.mrf.mxu0
  %1184 = vdwg.mxu0
  %v1186 = vsel %vm1113, %v1137, 0
  %v1189 = vsel %vm1141, %v1003, 0
  %1191 = vmatprep.subr.bf16.mxu0 0
  %1192 = vmatpush1.bf16.msra.mxu0 0
  %1193 = vmatprep.subr.bf16.mxu0 0
  %1194 = vmatpush1.bf16.msra.mxu0 0
  %1195 = vmatprep.subr.bf16.mxu0 0
  %1196 = vmatpush1.bf16.msra.mxu0 0
  %1197 = vmatprep.subr.bf16.mxu0 0
  %1198 = vmatpush1.bf16.msra.mxu0 0
  %1199 = vmatprep.subr.bf16.mxu0 0
  %1200 = vmatpush1.bf16.msra.mxu0 0
  %1201 = vmatprep.subr.bf16.mxu0 0
  %1202 = vmatpush1.bf16.msra.mxu0 0
  %1203 = vmatprep.subr.bf16.mxu0 0
  %1204 = vmatpush1.bf16.msra.mxu0 0
  %1205 = vmatprep.subr.bf16.mxu0 0
  %1206 = vmatpush1.bf16.msra.mxu0 %v1189
  %1207 = vmatprep.subr.bf16.mxu0 0
  %1208 = vmatpush2.bf16.msra.mxu0 0
  %1209 = vmatprep.subr.bf16.mxu0 0
  %1210 = vmatpush2.bf16.msra.mxu0 0
  %1211 = vmatprep.subr.bf16.mxu0 0
  %1212 = vmatpush2.bf16.msra.mxu0 0
  %1213 = vmatprep.subr.bf16.mxu0 0
  %1214 = vmatpush2.bf16.msra.mxu0 0
  %1215 = vmatprep.subr.bf16.mxu0 0
  %1216 = vmatpush2.bf16.msra.mxu0 0
  %1217 = vmatprep.subr.bf16.mxu0 0
  %1218 = vmatpush2.bf16.msra.mxu0 0
  %1219 = vmatprep.subr.bf16.mxu0 0
  %1220 = vmatpush2.bf16.msra.mxu0 0
  %1221 = vmatprep.subr.bf16.mxu0 0
  %1222 = vmatpush2.bf16.msra.mxu0 0
  %1223 = vmatprep.mubr.bf16.mxu0 0
  %1224 = vmatmul.mubr.bf16.gmra.mxu0 %v1186
  %v1225 = vpop.f32.mrf.mxu0
  %v1226 = vadd.f32 0.0, %v1225
  %v1227 = vpop.f32.mrf.mxu0
  %v1228 = vpop.f32.mrf.mxu0
  %v1229 = vpop.f32.mrf.mxu0
  %1230 = vdwg.mxu0
  %1231 = vst.msk [vmem:[#allocation2] sm:$0xff] %vm1018, %v1180
  %1232 = vst.msk [vmem:[#allocation2 + $0x8] sm:$0xff] %vm1018, %v1226
  %v1234 = vunpack.c.l.b16 %v993
  %v1235 = vunpack.c.h.b16 %v993
  %v1236 = vpack.c.b16 %v1234, %v1234
  %v1237 = vpack.c.b16 %v1235, %v1235
  %1238 = vrot.lane.b32.xlu0 %v1002, 64
  %v1239 = vpop.permute.xlu0 %1238
  %v1241 = vsel %vm1018, %v1239, 0
  %v1244 = vsel %vm1018, %v1236, 0
  %1246 = vmatprep.subr.bf16.mxu0 0
  %1247 = vmatpush1.bf16.xpose.msra.mxu0 0
  %1248 = vmatprep.subr.bf16.mxu0 0
  %1249 = vmatpush1.bf16.xpose.msra.mxu0 0
  %1250 = vmatprep.subr.bf16.mxu0 0
  %1251 = vmatpush1.bf16.xpose.msra.mxu0 0
  %1252 = vmatprep.subr.bf16.mxu0 0
  %1253 = vmatpush1.bf16.xpose.msra.mxu0 0
  %1254 = vmatprep.subr.bf16.mxu0 0
  %1255 = vmatpush1.bf16.xpose.msra.mxu0 0
  %1256 = vmatprep.subr.bf16.mxu0 0
  %1257 = vmatpush1.bf16.xpose.msra.mxu0 0
  %1258 = vmatprep.subr.bf16.mxu0 0
  %1259 = vmatpush1.bf16.xpose.msra.mxu0 0
  %1260 = vmatprep.subr.bf16.mxu0 0
  %1261 = vmatpush1.bf16.xpose.msra.mxu0 %v1244
  %1262 = vmatprep.subr.bf16.mxu0 0
  %1263 = vmatpush2.bf16.xpose.msra.mxu0 0
  %1264 = vmatprep.subr.bf16.mxu0 0
  %1265 = vmatpush2.bf16.xpose.msra.mxu0 0
  %1266 = vmatprep.subr.bf16.mxu0 0
  %1267 = vmatpush2.bf16.xpose.msra.mxu0 0
  %1268 = vmatprep.subr.bf16.mxu0 0
  %1269 = vmatpush2.bf16.xpose.msra.mxu0 0
  %1270 = vmatprep.subr.bf16.mxu0 0
  %1271 = vmatpush2.bf16.xpose.msra.mxu0 0
  %1272 = vmatprep.subr.bf16.mxu0 0
  %1273 = vmatpush2.bf16.xpose.msra.mxu0 0
  %1274 = vmatprep.subr.bf16.mxu0 0
  %1275 = vmatpush2.bf16.xpose.msra.mxu0 0
  %1276 = vmatprep.subr.bf16.mxu0 0
  %1277 = vmatpush2.bf16.xpose.msra.mxu0 0
  %1278 = vmatprep.mubr.bf16.mxu0 0
  %1279 = vmatmul.mubr.bf16.gmra.mxu0 %v1241
  %v1280 = vpop.f32.mrf.mxu0
  %v1281 = vadd.f32 %v1009, %v1280
  %v1282 = vpop.f32.mrf.mxu0
  %v1283 = vpop.f32.mrf.mxu0
  %v1284 = vpop.f32.mrf.mxu0
  %1285 = vdwg.mxu0
  %1286 = vrot.lane.b32.xlu0 %v1003, 64
  %v1287 = vpop.permute.xlu0 %1286
  %v1289 = vsel %vm1018, %v1287, 0
  %v1292 = vsel %vm1018, %v1237, 0
  %1294 = vmatprep.subr.bf16.mxu0 0
  %1295 = vmatpush1.bf16.xpose.msra.mxu0 0
  %1296 = vmatprep.subr.bf16.mxu0 0
  %1297 = vmatpush1.bf16.xpose.msra.mxu0 0
  %1298 = vmatprep.subr.bf16.mxu0 0
  %1299 = vmatpush1.bf16.xpose.msra.mxu0 0
  %1300 = vmatprep.subr.bf16.mxu0 0
  %1301 = vmatpush1.bf16.xpose.msra.mxu0 0
  %1302 = vmatprep.subr.bf16.mxu0 0
  %1303 = vmatpush1.bf16.xpose.msra.mxu0 0
  %1304 = vmatprep.subr.bf16.mxu0 0
  %1305 = vmatpush1.bf16.xpose.msra.mxu0 0
  %1306 = vmatprep.subr.bf16.mxu0 0
  %1307 = vmatpush1.bf16.xpose.msra.mxu0 0
  %1308 = vmatprep.subr.bf16.mxu0 0
  %1309 = vmatpush1.bf16.xpose.msra.mxu0 %v1292
  %1310 = vmatprep.subr.bf16.mxu0 0
  %1311 = vmatpush2.bf16.xpose.msra.mxu0 0
  %1312 = vmatprep.subr.bf16.mxu0 0
  %1313 = vmatpush2.bf16.xpose.msra.mxu0 0
  %1314 = vmatprep.subr.bf16.mxu0 0
  %1315 = vmatpush2.bf16.xpose.msra.mxu0 0
  %1316 = vmatprep.subr.bf16.mxu0 0
  %1317 = vmatpush2.bf16.xpose.msra.mxu0 0
  %1318 = vmatprep.subr.bf16.mxu0 0
  %1319 = vmatpush2.bf16.xpose.msra.mxu0 0
  %1320 = vmatprep.subr.bf16.mxu0 0
  %1321 = vmatpush2.bf16.xpose.msra.mxu0 0
  %1322 = vmatprep.subr.bf16.mxu0 0
  %1323 = vmatpush2.bf16.xpose.msra.mxu0 0
  %1324 = vmatprep.subr.bf16.mxu0 0
  %1325 = vmatpush2.bf16.xpose.msra.mxu0 0
  %1326 = vmatprep.mubr.bf16.mxu0 0
  %1327 = vmatmul.mubr.bf16.gmra.mxu0 %v1289
  %v1328 = vpop.f32.mrf.mxu0
  %v1329 = vadd.f32 %v1013, %v1328
  %v1330 = vpop.f32.mrf.mxu0
  %v1331 = vpop.f32.mrf.mxu0
  %v1332 = vpop.f32.mrf.mxu0
  %1333 = vdwg.mxu0
  %v1334 = vsel %vm1113, %v1281, -inf
  %1335 = vmax.xlane.f32.xlu0 %v1334
  %v1336 = vpop.xlane.xlu0 %1335
  %v1337 = vsel %vm1113, %v1329, -inf
  %1338 = vmax.xlane.f32.xlu0 %v1337
  %v1339 = vpop.xlane.xlu0 %1338
  %v1340 = vsub.f32 %v1281, %v1336
  %v1341 = vsub.f32 %v1329, %v1339
  %v1342 = vmul.f32 %v1340, 1.442695
  %v1343 = vpow.pop %v1342
  %v1344 = vmul.f32 %v1341, 1.442695
  %v1345 = vpow.pop %v1344
  %v1346 = vsel %vm1113, %v1343, 0.0
  %1347 = vadd.xlane.f32.xlu0 %v1346
  %v1348 = vpop.xlane.xlu0 %1347
  %v1349 = vsel %vm1113, %v1345, 0.0
  %1350 = vadd.xlane.f32.xlu0 %v1349
  %v1351 = vpop.xlane.xlu0 %1350
  %v1352 = vrcp.pop %v1348
  %v1353 = vrcp.pop %v1351
  %v1354 = vmul.f32 %v1343, %v1352
  %v1355 = vmul.f32 %v1345, %v1353
  %v1356 = vpack.c.bf16 %v1354, %v1354
  %v1357 = vpack.c.bf16 %v1355, %v1355
  %1358 = vrot.lane.b32.xlu0 %v1236, 64
  %v1359 = vpop.permute.xlu0 %1358
  %v1361 = vsel %vm1113, %v1356, 0
  %v1364 = vsel %vm1141, %v1359, 0
  %1366 = vmatprep.subr.bf16.mxu0 0
  %1367 = vmatpush1.bf16.msra.mxu0 0
  %1368 = vmatprep.subr.bf16.mxu0 0
  %1369 = vmatpush1.bf16.msra.mxu0 0
  %1370 = vmatprep.subr.bf16.mxu0 0
  %1371 = vmatpush1.bf16.msra.mxu0 0
  %1372 = vmatprep.subr.bf16.mxu0 0
  %1373 = vmatpush1.bf16.msra.mxu0 0
  %1374 = vmatprep.subr.bf16.mxu0 0
  %1375 = vmatpush1.bf16.msra.mxu0 0
  %1376 = vmatprep.subr.bf16.mxu0 0
  %1377 = vmatpush1.bf16.msra.mxu0 0
  %1378 = vmatprep.subr.bf16.mxu0 0
  %1379 = vmatpush1.bf16.msra.mxu0 0
  %1380 = vmatprep.subr.bf16.mxu0 0
  %1381 = vmatpush1.bf16.msra.mxu0 %v1364
  %1382 = vmatprep.subr.bf16.mxu0 0
  %1383 = vmatpush2.bf16.msra.mxu0 0
  %1384 = vmatprep.subr.bf16.mxu0 0
  %1385 = vmatpush2.bf16.msra.mxu0 0
  %1386 = vmatprep.subr.bf16.mxu0 0
  %1387 = vmatpush2.bf16.msra.mxu0 0
  %1388 = vmatprep.subr.bf16.mxu0 0
  %1389 = vmatpush2.bf16.msra.mxu0 0
  %1390 = vmatprep.subr.bf16.mxu0 0
  %1391 = vmatpush2.bf16.msra.mxu0 0
  %1392 = vmatprep.subr.bf16.mxu0 0
  %1393 = vmatpush2.bf16.msra.mxu0 0
  %1394 = vmatprep.subr.bf16.mxu0 0
  %1395 = vmatpush2.bf16.msra.mxu0 0
  %1396 = vmatprep.subr.bf16.mxu0 0
  %1397 = vmatpush2.bf16.msra.mxu0 0
  %1398 = vmatprep.mubr.bf16.mxu0 0
  %1399 = vmatmul.mubr.bf16.gmra.mxu0 %v1361
  %v1400 = vpop.f32.mrf.mxu0
  %v1401 = vadd.f32 0.0, %v1400
  %v1402 = vpop.f32.mrf.mxu0
  %v1403 = vpop.f32.mrf.mxu0
  %v1404 = vpop.f32.mrf.mxu0
  %1405 = vdwg.mxu0
  %1406 = vrot.lane.b32.xlu0 %v1237, 64
  %v1407 = vpop.permute.xlu0 %1406
  %v1409 = vsel %vm1113, %v1357, 0
  %v1412 = vsel %vm1141, %v1407, 0
  %1414 = vmatprep.subr.bf16.mxu0 0
  %1415 = vmatpush1.bf16.msra.mxu0 0
  %1416 = vmatprep.subr.bf16.mxu0 0
  %1417 = vmatpush1.bf16.msra.mxu0 0
  %1418 = vmatprep.subr.bf16.mxu0 0
  %1419 = vmatpush1.bf16.msra.mxu0 0
  %1420 = vmatprep.subr.bf16.mxu0 0
  %1421 = vmatpush1.bf16.msra.mxu0 0
  %1422 = vmatprep.subr.bf16.mxu0 0
  %1423 = vmatpush1.bf16.msra.mxu0 0
  %1424 = vmatprep.subr.bf16.mxu0 0
  %1425 = vmatpush1.bf16.msra.mxu0 0
  %1426 = vmatprep.subr.bf16.mxu0 0
  %1427 = vmatpush1.bf16.msra.mxu0 0
  %1428 = vmatprep.subr.bf16.mxu0 0
  %1429 = vmatpush1.bf16.msra.mxu0 %v1412
  %1430 = vmatprep.subr.bf16.mxu0 0
  %1431 = vmatpush2.bf16.msra.mxu0 0
  %1432 = vmatprep.subr.bf16.mxu0 0
  %1433 = vmatpush2.bf16.msra.mxu0 0
  %1434 = vmatprep.subr.bf16.mxu0 0
  %1435 = vmatpush2.bf16.msra.mxu0 0
  %1436 = vmatprep.subr.bf16.mxu0 0
  %1437 = vmatpush2.bf16.msra.mxu0 0
  %1438 = vmatprep.subr.bf16.mxu0 0
  %1439 = vmatpush2.bf16.msra.mxu0 0
  %1440 = vmatprep.subr.bf16.mxu0 0
  %1441 = vmatpush2.bf16.msra.mxu0 0
  %1442 = vmatprep.subr.bf16.mxu0 0
  %1443 = vmatpush2.bf16.msra.mxu0 0
  %1444 = vmatprep.subr.bf16.mxu0 0
  %1445 = vmatpush2.bf16.msra.mxu0 0
  %1446 = vmatprep.mubr.bf16.mxu0 0
  %1447 = vmatmul.mubr.bf16.gmra.mxu0 %v1409
  %v1448 = vpop.f32.mrf.mxu0
  %v1449 = vadd.f32 0.0, %v1448
  %v1450 = vpop.f32.mrf.mxu0
  %v1451 = vpop.f32.mrf.mxu0
  %v1452 = vpop.f32.mrf.mxu0
  %1453 = vdwg.mxu0
  %1456 = vrot.lane.b32.xlu0 %v1401, 64
  %v1457 = vpop.permute.xlu0 %1456
  %1458 = vrot.lane.b32.xlu0 %v1449, 64
  %v1459 = vpop.permute.xlu0 %1458
  %vm1462 = vcmask 1048064
  %1463 = vst.msk [vmem:[#allocation2] sm:$0xff] %vm1462, %v1457
  %1464 = vst.msk [vmem:[#allocation2 + $0x8] sm:$0xff] %vm1462, %v1459
  %v1465 = vld [vmem:[#allocation2] sm:$0xff]
  %v1466 = vld [vmem:[#allocation2 + $0x8] sm:$0xff]
  %v1467 = vld [vmem:[%s8 + $0x2] sm:$0x1]
  %v1468 = vld [vmem:[%s8 + $0x3] sm:$0x1]
  %1469 = vadd.xlane.f32.xlu0 %v1465
  %v1470 = vpop.xlane.xlu0 %1469
  %1471 = vadd.xlane.f32.xlu0 %v1466
  %v1472 = vpop.xlane.xlu0 %1471
  %v1473 = vmul.f32 %v1470, 0.010416667
  %v1474 = vmul.f32 %v1472, 0.010416667
  %v1475 = vmul.f32 %v1465, %v1465
  %v1476 = vmul.f32 %v1466, %v1466
  %1477 = vadd.xlane.f32.xlu0 %v1475
  %v1478 = vpop.xlane.xlu0 %1477
  %1479 = vadd.xlane.f32.xlu0 %v1476
  %v1480 = vpop.xlane.xlu0 %1479
  %v1481 = vmul.f32 %v1478, 0.010416667
  %v1482 = vmul.f32 %v1480, 0.010416667
  %v1483 = vmul.f32 %v1473, %v1473
  %v1484 = vmul.f32 %v1474, %v1474
  %v1485 = vsub.f32 %v1481, %v1483
  %v1486 = vsub.f32 %v1482, %v1484
  %v1487 = vmax.f32 %v1485, 0.0
  %v1488 = vmax.f32 %v1486, 0.0
  %v1489 = vsub.f32 %v1465, %v1473
  %v1490 = vsub.f32 %v1466, %v1474
  %v1491 = vadd.f32 %v1487, 1e-05
  %v1492 = vadd.f32 %v1488, 1e-05
  %v1493 = vrsqrt.pop %v1491
  %v1494 = vrsqrt.pop %v1492
  %v1495 = vmul.f32 %v1489, %v1493
  %v1496 = vmul.f32 %v1490, %v1494
  %v1497 = vlaneseq
  %v1498 = vshrl.u32 %v1497, 7
  %v1499 = vsub.s32 0, %v1498
  %v1500 = vrot.slane %v1467, %v1499
  %v1501 = vmul.f32 %v1495, %v1500
  %v1502 = vmul.f32 %v1496, %v1500
  %v1503 = vlaneseq
  %v1504 = vshrl.u32 %v1503, 7
  %v1505 = vsub.s32 0, %v1504
  %v1506 = vrot.slane %v1468, %v1505
  %v1507 = vadd.f32 %v1501, %v1506
  %v1508 = vadd.f32 %v1502, %v1506
  %v1509 = vpack.c.bf16 %v1508, %v1507
  %v1510 = vld [vmem:[%s10] sm:$0xf]
  %v1511 = vld [vmem:[%s10 + $0x4] sm:$0xf]
  %v1512 = vld [vmem:[%s10 + $0x8] sm:$0xf]
  %v1513 = vld [vmem:[%s10 + $0xc] sm:$0xf]
  %v1514 = vld [vmem:[%s10 + $0x10] sm:$0xf]
  %v1515 = vld [vmem:[%s10 + $0x14] sm:$0xf]
  %v1516 = vld [vmem:[%s10 + $0x18] sm:$0xf]
  %v1517 = vld [vmem:[%s10 + $0x1c] sm:$0xf]
  %v1518 = vld [vmem:[%s10 + $0x20] sm:$0xf]
  %v1519 = vld [vmem:[%s10 + $0x24] sm:$0xf]
  %v1520 = vld [vmem:[%s10 + $0x28] sm:$0xf]
  %v1521 = vld [vmem:[%s10 + $0x2c] sm:$0xf]
  %v1522 = vld [vmem:[%s10 + $0x30] sm:$0xf]
  %v1523 = vld [vmem:[%s10 + $0x34] sm:$0xf]
  %v1524 = vld [vmem:[%s10 + $0x38] sm:$0xf]
  %v1525 = vld [vmem:[%s10 + $0x3c] sm:$0xf]
  %v1526 = vld [vmem:[%s11] sm:$0x1]
  %v1527 = vlaneseq
  %v1528 = vshrl.u32 %v1527, 7
  %v1529 = vsub.s32 0, %v1528
  %v1530 = vrot.slane %v1526, %v1529
  %v1547 = vunpack.c.l.b16 %v1510
  %v1548 = vunpack.c.l.b16 %v1511
  %v1549 = vunpack.c.l.b16 %v1512
  %v1550 = vunpack.c.l.b16 %v1513
  %v1551 = vunpack.c.l.b16 %v1514
  %v1552 = vunpack.c.l.b16 %v1515
  %v1553 = vunpack.c.l.b16 %v1516
  %v1554 = vunpack.c.l.b16 %v1517
  %v1555 = vunpack.c.l.b16 %v1518
  %v1556 = vunpack.c.l.b16 %v1519
  %v1557 = vunpack.c.l.b16 %v1520
  %v1558 = vunpack.c.l.b16 %v1521
  %v1559 = vunpack.c.l.b16 %v1522
  %v1560 = vunpack.c.l.b16 %v1523
  %v1561 = vunpack.c.l.b16 %v1524
  %v1562 = vunpack.c.l.b16 %v1525
  %v1563 = vpack.c.b16 %v1548, %v1547
  %v1564 = vpack.c.b16 %v1550, %v1549
  %v1565 = vpack.c.b16 %v1552, %v1551
  %v1566 = vpack.c.b16 %v1554, %v1553
  %v1567 = vpack.c.b16 %v1556, %v1555
  %v1568 = vpack.c.b16 %v1558, %v1557
  %v1569 = vpack.c.b16 %v1560, %v1559
  %v1570 = vpack.c.b16 %v1562, %v1561
  %1579 = vmatprep.subr.bf16.mxu0 0
  %1580 = vmatpush1.bf16.msra.mxu0 %v1570
  %1581 = vmatprep.subr.bf16.mxu0 0
  %1582 = vmatpush1.bf16.msra.mxu0 %v1569
  %1583 = vmatprep.subr.bf16.mxu0 0
  %1584 = vmatpush1.bf16.msra.mxu0 %v1568
  %1585 = vmatprep.subr.bf16.mxu0 0
  %1586 = vmatpush1.bf16.msra.mxu0 %v1567
  %1587 = vmatprep.subr.bf16.mxu0 0
  %1588 = vmatpush1.bf16.msra.mxu0 %v1566
  %1589 = vmatprep.subr.bf16.mxu0 0
  %1590 = vmatpush1.bf16.msra.mxu0 %v1565
  %1591 = vmatprep.subr.bf16.mxu0 0
  %1592 = vmatpush1.bf16.msra.mxu0 %v1564
  %1593 = vmatprep.subr.bf16.mxu0 0
  %1594 = vmatpush1.bf16.msra.mxu0 %v1563
  %1595 = vmatprep.subr.bf16.mxu0 0
  %1596 = vmatpush2.bf16.msra.mxu0 0
  %1597 = vmatprep.subr.bf16.mxu0 0
  %1598 = vmatpush2.bf16.msra.mxu0 0
  %1599 = vmatprep.subr.bf16.mxu0 0
  %1600 = vmatpush2.bf16.msra.mxu0 0
  %1601 = vmatprep.subr.bf16.mxu0 0
  %1602 = vmatpush2.bf16.msra.mxu0 0
  %1603 = vmatprep.subr.bf16.mxu0 0
  %1604 = vmatpush2.bf16.msra.mxu0 0
  %1605 = vmatprep.subr.bf16.mxu0 0
  %1606 = vmatpush2.bf16.msra.mxu0 0
  %1607 = vmatprep.subr.bf16.mxu0 0
  %1608 = vmatpush2.bf16.msra.mxu0 0
  %1609 = vmatprep.subr.bf16.mxu0 0
  %1610 = vmatpush2.bf16.msra.mxu0 0
  %1611 = vmatprep.mubr.bf16.mxu0 0
  %1612 = vmatmul.mubr.bf16.gmra.mxu0 %v1509
  %v1613 = vpop.f32.mrf.mxu0
  %v1614 = vadd.f32 %v1530, %v1613
  %v1615 = vpop.f32.mrf.mxu0
  %v1616 = vpop.f32.mrf.mxu0
  %v1617 = vadd.f32 %v1530, %v1616
  %v1618 = vpop.f32.mrf.mxu0
  %1619 = vdwg.mxu0
  %v1620 = vmax.f32 %v1614, 0.0
  %v1621 = vmax.f32 %v1617, 0.0
  %v1622 = vpack.c.bf16 %v1621, %v1620
  %s1623 = scalar_lea.vmem %s10, 64
  %v1624 = vld [vmem:[%s1623] sm:$0xf]
  %v1625 = vld [vmem:[%s1623 + $0x4] sm:$0xf]
  %v1626 = vld [vmem:[%s1623 + $0x8] sm:$0xf]
  %v1627 = vld [vmem:[%s1623 + $0xc] sm:$0xf]
  %v1628 = vld [vmem:[%s1623 + $0x10] sm:$0xf]
  %v1629 = vld [vmem:[%s1623 + $0x14] sm:$0xf]
  %v1630 = vld [vmem:[%s1623 + $0x18] sm:$0xf]
  %v1631 = vld [vmem:[%s1623 + $0x1c] sm:$0xf]
  %v1632 = vld [vmem:[%s1623 + $0x20] sm:$0xf]
  %v1633 = vld [vmem:[%s1623 + $0x24] sm:$0xf]
  %v1634 = vld [vmem:[%s1623 + $0x28] sm:$0xf]
  %v1635 = vld [vmem:[%s1623 + $0x2c] sm:$0xf]
  %v1636 = vld [vmem:[%s1623 + $0x30] sm:$0xf]
  %v1637 = vld [vmem:[%s1623 + $0x34] sm:$0xf]
  %v1638 = vld [vmem:[%s1623 + $0x38] sm:$0xf]
  %v1639 = vld [vmem:[%s1623 + $0x3c] sm:$0xf]
  %v1640 = vld [vmem:[%s11 + $0x1] sm:$0x1]
  %v1641 = vlaneseq
  %v1642 = vshrl.u32 %v1641, 7
  %v1643 = vsub.s32 0, %v1642
  %v1644 = vrot.slane %v1640, %v1643
  %v1661 = vunpack.c.l.b16 %v1624
  %v1662 = vunpack.c.l.b16 %v1625
  %v1663 = vunpack.c.l.b16 %v1626
  %v1664 = vunpack.c.l.b16 %v1627
  %v1665 = vunpack.c.l.b16 %v1628
  %v1666 = vunpack.c.l.b16 %v1629
  %v1667 = vunpack.c.l.b16 %v1630
  %v1668 = vunpack.c.l.b16 %v1631
  %v1669 = vunpack.c.l.b16 %v1632
  %v1670 = vunpack.c.l.b16 %v1633
  %v1671 = vunpack.c.l.b16 %v1634
  %v1672 = vunpack.c.l.b16 %v1635
  %v1673 = vunpack.c.l.b16 %v1636
  %v1674 = vunpack.c.l.b16 %v1637
  %v1675 = vunpack.c.l.b16 %v1638
  %v1676 = vunpack.c.l.b16 %v1639
  %v1677 = vpack.c.b16 %v1662, %v1661
  %v1678 = vpack.c.b16 %v1664, %v1663
  %v1679 = vpack.c.b16 %v1666, %v1665
  %v1680 = vpack.c.b16 %v1668, %v1667
  %v1681 = vpack.c.b16 %v1670, %v1669
  %v1682 = vpack.c.b16 %v1672, %v1671
  %v1683 = vpack.c.b16 %v1674, %v1673
  %v1684 = vpack.c.b16 %v1676, %v1675
  %1693 = vmatprep.subr.bf16.mxu0 0
  %1694 = vmatpush1.bf16.msra.mxu0 %v1684
  %1695 = vmatprep.subr.bf16.mxu0 0
  %1696 = vmatpush1.bf16.msra.mxu0 %v1683
  %1697 = vmatprep.subr.bf16.mxu0 0
  %1698 = vmatpush1.bf16.msra.mxu0 %v1682
  %1699 = vmatprep.subr.bf16.mxu0 0
  %1700 = vmatpush1.bf16.msra.mxu0 %v1681
  %1701 = vmatprep.subr.bf16.mxu0 0
  %1702 = vmatpush1.bf16.msra.mxu0 %v1680
  %1703 = vmatprep.subr.bf16.mxu0 0
  %1704 = vmatpush1.bf16.msra.mxu0 %v1679
  %1705 = vmatprep.subr.bf16.mxu0 0
  %1706 = vmatpush1.bf16.msra.mxu0 %v1678
  %1707 = vmatprep.subr.bf16.mxu0 0
  %1708 = vmatpush1.bf16.msra.mxu0 %v1677
  %1709 = vmatprep.subr.bf16.mxu0 0
  %1710 = vmatpush2.bf16.msra.mxu0 0
  %1711 = vmatprep.subr.bf16.mxu0 0
  %1712 = vmatpush2.bf16.msra.mxu0 0
  %1713 = vmatprep.subr.bf16.mxu0 0
  %1714 = vmatpush2.bf16.msra.mxu0 0
  %1715 = vmatprep.subr.bf16.mxu0 0
  %1716 = vmatpush2.bf16.msra.mxu0 0
  %1717 = vmatprep.subr.bf16.mxu0 0
  %1718 = vmatpush2.bf16.msra.mxu0 0
  %1719 = vmatprep.subr.bf16.mxu0 0
  %1720 = vmatpush2.bf16.msra.mxu0 0
  %1721 = vmatprep.subr.bf16.mxu0 0
  %1722 = vmatpush2.bf16.msra.mxu0 0
  %1723 = vmatprep.subr.bf16.mxu0 0
  %1724 = vmatpush2.bf16.msra.mxu0 0
  %1725 = vmatprep.mubr.bf16.mxu0 0
  %1726 = vmatmul.mubr.bf16.gmra.mxu0 %v1622
  %v1727 = vpop.f32.mrf.mxu0
  %v1728 = vadd.f32 %v1644, %v1727
  %v1729 = vpop.f32.mrf.mxu0
  %v1730 = vpop.f32.mrf.mxu0
  %v1731 = vadd.f32 %v1644, %v1730
  %v1732 = vpop.f32.mrf.mxu0
  %1733 = vdwg.mxu0
  %v1734 = vpack.c.bf16 %v1731, %v1728
  %v1736 = vunpack.c.l.b16 %v1734
  %v1737 = vunpack.c.h.b16 %v1734
  %v1738 = vpack.c.b16 %v1736, %v1736
  %v1739 = vpack.c.b16 %v1737, %v1737
  %1742 = vst [vmem:[%s12] sm:$0xf] %v1738
  %1743 = vst [vmem:[%s12 + $0x4] sm:$0xf] %v1739
  // Predicated region
  $region50: #{encoder_block_forward.1} parent=0 // pred_check
    _
  $region51: #{encoder_block_forward.1} parent=0 // pred_check_branch
    %1745 = sbr.rel (0) target = $region53
  $region52: #{encoder_block_forward.1} parent=0 // pred_region
    _
  $region53: #{encoder_block_forward.1} parent=0 // pred_fallthru
    _
  // Predicated region
  $region54: #{encoder_block_forward.1} parent=0 // pred_check
    _
  $region55: #{encoder_block_forward.1} parent=0 // pred_check_branch
    %1747 = sbr.rel (0) target = $region57
  $region56: #{encoder_block_forward.1} parent=0 // pred_region
    _
  $region57: #{encoder_block_forward.1} parent=0 // pred_fallthru
    _

</llo_original>
